<compile_context>
chip_gen: v6e
topology: v6e:2x2x1
jax: 0.10.0
libtpu: 0.0.40
codegen_flags: <defaults>
</compile_context>

<pallas_src>
import functools

import jax
import jax.numpy as jnp
from jax.experimental import pallas as pl
from jax.experimental.pallas import tpu as pltpu

BN_EPS = 1e-5


def _round_up(x, m):
    return (x + m - 1) // m * m


# ---------------------------------------------------------------------------
# Kernel
# ---------------------------------------------------------------------------
def _regd_kernel(
    x_ref,        # (tm, tk)   bf16   input tile (flattened image features)
    wbb_ref,      # (tk, D)    bf16   backbone weight tile
    bbb_ref,      # (1, D)     f32    backbone bias
    wbt_ref,      # (D, BDp)   bf16   bottleneck weight (BN folded, padded)
    bbt_ref,      # (1, BDp)   f32    bottleneck bias   (BN folded, padded)
    wh_ref,       # (BDp, NCp) bf16   head weight (padded)
    bh_ref,       # (1, NCp)   f32    head bias (padded)
    wuc_ref,      # (D, UCp)   bf16   [u_head | u_only_head] fused weight (padded)
    buc_ref,      # (1, UCp)   f32    fused u-head bias (padded)
    *out_and_scratch,
    emit_features,
):
    if emit_features:
        pred_ref, ucat_ref, f_ref, f1_ref, acc_ref = out_and_scratch
    else:
        pred_ref, ucat_ref, acc_ref = out_and_scratch
        f_ref = f1_ref = None

    k = pl.program_id(1)

    @pl.when(k == 0)
    def _():
        acc_ref[...] = jnp.zeros_like(acc_ref)

    # Backbone Linear contraction over the IN (K) axis, f32 accumulation on the MXU.
    acc_ref[...] += jnp.dot(
        x_ref[...], wbb_ref[...], preferred_element_type=jnp.float32
    )

    @pl.when(k == pl.num_programs(1) - 1)
    def _():
        # backbone: bias + ReLU
        f = jnp.maximum(acc_ref[...] + bbb_ref[...], 0.0)          # (tm, D) f32
        f_bf = f.astype(jnp.bfloat16)

        # bottleneck: Linear with BatchNorm1d(eval) pre-folded, then ReLU.
        z = jnp.dot(f_bf, wbt_ref[...], preferred_element_type=jnp.float32)
        f1 = jnp.maximum(z + bbt_ref[...], 0.0)                     # (tm, BDp) f32
        f1_bf = f1.astype(jnp.bfloat16)

        # dropout (eval mode) -> identity: f1_drop == f1
        # head(f1_drop)
        pred_ref[...] = (
            jnp.dot(f1_bf, wh_ref[...], preferred_element_type=jnp.float32)
            + bh_ref[...]
        )
        # fused [u_head(f) | u_only_head(f)]
        ucat_ref[...] = (
            jnp.dot(f_bf, wuc_ref[...], preferred_element_type=jnp.float32)
            + buc_ref[...]
        )

        if f_ref is not None:
            f_ref[...] = f
        if f1_ref is not None:
            f1_ref[...] = f1


# ---------------------------------------------------------------------------
# Parameter preparation (one-time, host side)
# ---------------------------------------------------------------------------
def prepare_params(p):
    """Fold eval-mode BN into the bottleneck Linear, fuse/pad heads, cast weights to bf16."""
    D = p["wbb"].shape[1]
    BD = p["wbt"].shape[1]
    NC = p["wh"].shape[1]
    BDp = _round_up(BD, 128)
    NCp = _round_up(NC, 128)
    UCp = _round_up(2 * NC, 128)

    # BN (eval) folding:  y = (x@W + b - mean) * gamma/sqrt(var+eps) + beta
    scale = p["gamma"] / jnp.sqrt(p["var"] + BN_EPS)              # (1, BD)
    wbt_f = p["wbt"] * scale                                      # (D, BD)
    bbt_f = (p["bbt"] - p["mean"]) * scale + p["beta"]            # (1, BD)

    def pad_cols(a, to):
        return jnp.pad(a, ((0, 0), (0, to - a.shape[1])))

    def pad_rows(a, to):
        return jnp.pad(a, ((0, to - a.shape[0]), (0, 0)))

    wh = pad_rows(pad_cols(p["wh"], NCp), BDp)                    # (BDp, NCp)
    bh = pad_cols(p["bh"], NCp)                                   # (1, NCp)
    wuc = pad_cols(jnp.concatenate([p["wu"], p["wuo"]], axis=1), UCp)   # (D, UCp)
    buc = pad_cols(jnp.concatenate([p["bu"], p["buo"]], axis=1), UCp)   # (1, UCp)

    bf16 = jnp.bfloat16
    return {
        "wbb": p["wbb"].astype(bf16),
        "bbb": p["bbb"].astype(jnp.float32),
        "wbt": pad_cols(wbt_f, BDp).astype(bf16),
        "bbt": pad_cols(bbt_f, BDp).astype(jnp.float32),
        "wh": wh.astype(bf16),
        "bh": bh.astype(jnp.float32),
        "wuc": wuc.astype(bf16),
        "buc": buc.astype(jnp.float32),
        "num_classes": NC,
        "bottleneck_dim": BD,
        "d_out": D,
    }


# ---------------------------------------------------------------------------
# Wrapper
# ---------------------------------------------------------------------------
def regd_forward(x_nchw, pp, rich_outputs=True, *, tm=128, tk=512):
    """Fused RegDNetwork forward. x_nchw: (B, C, H, W) float32, pp: prepare_params(...)."""
    B = x_nchw.shape[0]
    x = x_nchw.reshape(B, -1)
    IN = x.shape[1]

    wbb = pp["wbb"]
    D = wbb.shape[1]
    BDp = pp["wbt"].shape[1]
    NCp = pp["wh"].shape[1]
    UCp = pp["wuc"].shape[1]
    NC = pp["num_classes"]
    BD = pp["bottleneck_dim"]

    # Tile sizes: bf16-friendly sublanes (mult of 16) / lanes (mult of 128).
    tm = _round_up(max(16, min(tm, _round_up(B, 16))), 16)
    tk = _round_up(max(128, min(tk, _round_up(IN, 128))), 128)

    Bp = _round_up(B, tm)
    INp = _round_up(IN, tk)

    x = x.astype(jnp.bfloat16)
    if (Bp, INp) != (B, IN):
        x = jnp.pad(x, ((0, Bp - B), (0, INp - IN)))
    if INp != wbb.shape[0]:
        wbb = jnp.pad(wbb, ((0, INp - wbb.shape[0]), (0, 0)))

    grid = (Bp // tm, INp // tk)

    in_specs = [
        pl.BlockSpec((tm, tk), lambda i, k: (i, k)),     # x
        pl.BlockSpec((tk, D), lambda i, k: (k, 0)),      # wbb
        pl.BlockSpec((1, D), lambda i, k: (0, 0)),       # bbb
        pl.BlockSpec((D, BDp), lambda i, k: (0, 0)),     # wbt (BN folded)
        pl.BlockSpec((1, BDp), lambda i, k: (0, 0)),     # bbt (BN folded)
        pl.BlockSpec((BDp, NCp), lambda i, k: (0, 0)),   # wh
        pl.BlockSpec((1, NCp), lambda i, k: (0, 0)),     # bh
        pl.BlockSpec((D, UCp), lambda i, k: (0, 0)),     # wu|wuo fused
        pl.BlockSpec((1, UCp), lambda i, k: (0, 0)),     # bu|buo fused
    ]

    out_shapes = [
        jax.ShapeDtypeStruct((Bp, NCp), jnp.float32),    # head logits (padded)
        jax.ShapeDtypeStruct((Bp, UCp), jnp.float32),    # [u | u_only] logits (padded)
    ]
    out_specs = [
        pl.BlockSpec((tm, NCp), lambda i, k: (i, 0)),
        pl.BlockSpec((tm, UCp), lambda i, k: (i, 0)),
    ]
    if rich_outputs:
        out_shapes += [
            jax.ShapeDtypeStruct((Bp, D), jnp.float32),    # f
            jax.ShapeDtypeStruct((Bp, BDp), jnp.float32),  # f1 (padded)
        ]
        out_specs += [
            pl.BlockSpec((tm, D), lambda i, k: (i, 0)),
            pl.BlockSpec((tm, BDp), lambda i, k: (i, 0)),
        ]

    outs = pl.pallas_call(
        functools.partial(_regd_kernel, emit_features=rich_outputs),
        out_shape=tuple(out_shapes),
        grid_spec=pltpu.PrefetchScalarGridSpec(
            num_scalar_prefetch=0,
            grid=grid,
            in_specs=in_specs,
            out_specs=tuple(out_specs),
            scratch_shapes=[pltpu.VMEM((tm, D), jnp.float32)],
        ),
        compiler_params=pltpu.CompilerParams(
            dimension_semantics=("parallel", "arbitrary"),
            vmem_limit_bytes=32 * 1024 * 1024,
        ),
    )(
        x, wbb, pp["bbb"],
        pp["wbt"], pp["bbt"],
        pp["wh"], pp["bh"],
        pp["wuc"], pp["buc"],
    )

    pred_p, ucat_p = outs[0], outs[1]
    predictions = pred_p[:B, :NC]
    if not rich_outputs:
        return predictions

    u_preds = ucat_p[:B, :NC]
    u_only_preds = ucat_p[:B, NC:2 * NC]
    f = outs[2][:B, :D]
    f1 = outs[3][:B, :BD]

    # .detach() variants are numerically identical (autodiff-only difference).
    return {
        "y": predictions,
        "y_cluster_all": u_preds,
        "feature": f,
        "bottleneck_feature": f1,
        "y_nograd": predictions,
        "y_cluster_all_nograd": u_preds,
        "y_cluster_u": u_only_preds,
        "y_cluster_u_nograd": u_only_preds,
    }


# ---------------------------------------------------------------------------
# Synthetic parameter init (PyTorch-Linear-style) + references
# ---------------------------------------------------------------------------
def init_params(key, in_dim, d_out, bottleneck_dim, num_classes):
    """Deterministic PyTorch-style uniform init; weights stored transposed (in, out), f32."""
    ks = jax.random.split(key, 12)

    def lin(kw, kb, fan_in, fan_out):
        bound = 1.0 / jnp.sqrt(fan_in)
        w = jax.random.uniform(kw, (fan_in, fan_out), jnp.float32, -bound, bound)
        b = jax.random.uniform(kb, (1, fan_out), jnp.float32, -bound, bound)
        return w, b

    wbb, bbb = lin(ks[0], ks[1], in_dim, d_out)
    wbt, bbt = lin(ks[2], ks[3], d_out, bottleneck_dim)
    wh, bh = lin(ks[4], ks[5], bottleneck_dim, num_classes)
    wu, bu = lin(ks[6], ks[7], d_out, num_classes)
    wuo, buo = lin(ks[8], ks[9], d_out, num_classes)

    gamma = 1.0 + 0.1 * jax.random.normal(ks[10], (1, bottleneck_dim), jnp.float32)
    beta = 0.05 * jax.random.normal(ks[11], (1, bottleneck_dim), jnp.float32)
    mean = 0.1 * jnp.ones((1, bottleneck_dim), jnp.float32)
    var = 0.9 * jnp.ones((1, bottleneck_dim), jnp.float32)

    return {
        "wbb": wbb, "bbb": bbb,
        "wbt": wbt, "bbt": bbt,
        "gamma": gamma, "beta": beta, "mean": mean, "var": var,
        "wh": wh, "bh": bh,
        "wu": wu, "bu": bu,
        "wuo": wuo, "buo": buo,
    }


def reference_forward_quantized(x_nchw, pp):
    """Pure-JAX reference mirroring the kernel's bf16 quantization (tight check)."""
    f32 = jnp.float32
    x = x_nchw.reshape(x_nchw.shape[0], -1).astype(jnp.bfloat16).astype(f32)
    f = jnp.maximum(x @ pp["wbb"].astype(f32) + pp["bbb"], 0.0)
    f_bf = f.astype(jnp.bfloat16).astype(f32)
    f1 = jnp.maximum(f_bf @ pp["wbt"].astype(f32) + pp["bbt"], 0.0)
    f1_bf = f1.astype(jnp.bfloat16).astype(f32)
    pred = f1_bf @ pp["wh"].astype(f32) + pp["bh"]
    ucat = f_bf @ pp["wuc"].astype(f32) + pp["buc"]
    NC, BD = pp["num_classes"], pp["bottleneck_dim"]
    return {
        "y": pred[:, :NC],
        "y_cluster_all": ucat[:, :NC],
        "y_cluster_u": ucat[:, NC:2 * NC],
        "feature": f,
        "bottleneck_feature": f1[:, :BD],
    }


def reference_forward_f32(x_nchw, p):
    """Full-precision, BN-unfused reference of the original module semantics (loose check)."""
    x = x_nchw.reshape(x_nchw.shape[0], -1)
    f = jnp.maximum(x @ p["wbb"] + p["bbb"], 0.0)
    z = f @ p["wbt"] + p["bbt"]
    z = (z - p["mean"]) / jnp.sqrt(p["var"] + BN_EPS) * p["gamma"] + p["beta"]
    f1 = jnp.maximum(z, 0.0)
    return {
        "y": f1 @ p["wh"] + p["bh"],
        "y_cluster_all": f @ p["wu"] + p["bu"],
        "y_cluster_u": f @ p["wuo"] + p["buo"],
        "feature": f,
        "bottleneck_feature": f1,
    }


if __name__ == "__main__":
    B, C, H, W = 32, 4, 16, 16           # NCHW input
    IN_DIM = C * H * W                   # 1024
    D_OUT = 256                          # backbone.d_out
    BOTTLENECK = 64                      # bottleneck_dim
    NUM_CLASSES = 16

    key = jax.random.PRNGKey(0)
    kx, kp = jax.random.split(key)
    x = jax.random.normal(kx, (B, C, H, W), jnp.float32)
    params = init_params(kp, IN_DIM, D_OUT, BOTTLENECK, NUM_CLASSES)
    pp = prepare_params(params)

    # Small tiles to exercise the (M, K) grid at these toy shapes: grid = (2, 4).
    out = regd_forward(x, pp, rich_outputs=True, tm=16, tk=256)
    jax.block_until_ready(out)

    keys_to_check = ("y", "y_cluster_all", "y_cluster_u", "feature", "bottleneck_feature")

    # Tight check against a reference with identical bf16 quantization.
    qref = reference_forward_quantized(x, pp)
    for k in keys_to_check:
        assert jnp.allclose(out[k], qref[k], atol=5e-3, rtol=5e-3), f"quantized ref mismatch: {k}"

    # Loose check against the original f32, BN-unfused module semantics.
    fref = reference_forward_f32(x, params)
    for k in keys_to_check:
        assert jnp.allclose(out[k], fref[k], atol=5e-2, rtol=5e-2), f"f32 ref mismatch: {k}"

    # Predictions-only variant (no feature writeback to HBM).
    y_only = regd_forward(x, pp, rich_outputs=False, tm=16, tk=256)
    jax.block_until_ready(y_only)
    assert jnp.allclose(y_only, out["y"], atol=1e-5, rtol=1e-5), "rich vs plain mismatch"

    print("KERNEL_OK")
</pallas_src>

<mosaic_0001>
module attributes {stable_mosaic.version = 11 : i64} {
  func.func @_regd_kernel(%arg0: i32, %arg1: i32, %arg2: memref<16x256xbf16, #tpu.memory_space<vmem>>, %arg3: memref<256x256xbf16, #tpu.memory_space<vmem>>, %arg4: memref<1x256xf32, #tpu.memory_space<vmem>>, %arg5: memref<256x128xbf16, #tpu.memory_space<vmem>>, %arg6: memref<1x128xf32, #tpu.memory_space<vmem>>, %arg7: memref<128x128xbf16, #tpu.memory_space<vmem>>, %arg8: memref<1x128xf32, #tpu.memory_space<vmem>>, %arg9: memref<256x128xbf16, #tpu.memory_space<vmem>>, %arg10: memref<1x128xf32, #tpu.memory_space<vmem>>, %arg11: memref<16x128xf32, #tpu.memory_space<vmem>>, %arg12: memref<16x128xf32, #tpu.memory_space<vmem>>, %arg13: memref<16x256xf32, #tpu.memory_space<vmem>>, %arg14: memref<16x128xf32, #tpu.memory_space<vmem>>, %arg15: memref<16x256xf32, #tpu.memory_space<vmem>>) attributes {dimension_semantics = [#tpu.dimension_semantics<parallel>, #tpu.dimension_semantics<arbitrary>], iteration_bounds = array<i64: 2, 4>, scalar_prefetch = 0 : i64, scratch_operands = 1 : i64, tpu.core_type = #tpu.core_type<tc>, window_params = [{transform_indices = @transform_0, window_bounds = array<i64: 16, 256>}, {transform_indices = @transform_1, window_bounds = array<i64: 256, 256>}, {pipeline_mode = #tpu.pipeline_mode<synchronous>, transform_indices = @transform_2, window_bounds = array<i64: 1, 256>}, {pipeline_mode = #tpu.pipeline_mode<synchronous>, transform_indices = @transform_3, window_bounds = array<i64: 256, 128>}, {pipeline_mode = #tpu.pipeline_mode<synchronous>, transform_indices = @transform_4, window_bounds = array<i64: 1, 128>}, {pipeline_mode = #tpu.pipeline_mode<synchronous>, transform_indices = @transform_5, window_bounds = array<i64: 128, 128>}, {pipeline_mode = #tpu.pipeline_mode<synchronous>, transform_indices = @transform_6, window_bounds = array<i64: 1, 128>}, {pipeline_mode = #tpu.pipeline_mode<synchronous>, transform_indices = @transform_7, window_bounds = array<i64: 256, 128>}, {pipeline_mode = #tpu.pipeline_mode<synchronous>, transform_indices = @transform_8, window_bounds = array<i64: 1, 128>}, {transform_indices = @transform_9, window_bounds = array<i64: 16, 128>}, {transform_indices = @transform_10, window_bounds = array<i64: 16, 128>}, {transform_indices = @transform_11, window_bounds = array<i64: 16, 256>}, {transform_indices = @transform_12, window_bounds = array<i64: 16, 128>}]} {
    %c0_i32 = arith.constant 0 : i32
    %0 = arith.cmpi eq, %arg1, %c0_i32 : i32
    %1 = arith.extui %0 : i1 to i32
    %c0_i32_0 = arith.constant 0 : i32
    %2 = arith.cmpi ne, %1, %c0_i32_0 : i32
    scf.if %2 {
      %cst_9 = arith.constant 0.000000e+00 : f32
      %12 = vector.broadcast %cst_9 : f32 to vector<16x256xf32>
      %c0_10 = arith.constant 0 : index
      %c0_11 = arith.constant 0 : index
      %13 = vector.load %arg15[%c0_10, %c0_11] : memref<16x256xf32, #tpu.memory_space<vmem>>, vector<16x256xf32>
      tpu.vector_store %arg15[%c0_10, %c0_11], %12 {strides = array<i32>} : memref<16x256xf32, #tpu.memory_space<vmem>>, vector<16x256xf32>,
    } else {
    }
    %c0 = arith.constant 0 : index
    %c0_1 = arith.constant 0 : index
    %3 = vector.load %arg15[%c0, %c0_1] : memref<16x256xf32, #tpu.memory_space<vmem>>, vector<16x256xf32>
    %c0_2 = arith.constant 0 : index
    %c0_3 = arith.constant 0 : index
    %4 = vector.load %arg2[%c0_2, %c0_3] : memref<16x256xbf16, #tpu.memory_space<vmem>>, vector<16x256xbf16>
    %c0_4 = arith.constant 0 : index
    %c0_5 = arith.constant 0 : index
    %5 = vector.load %arg3[%c0_4, %c0_5] : memref<256x256xbf16, #tpu.memory_space<vmem>>, vector<256x256xbf16>
    %cst = arith.constant dense<0.000000e+00> : vector<16x256xf32>
    %6 = tpu.matmul %4, %5, %cst {dimension_numbers = #tpu.dot_dimension_numbers<[1], [0], [0], [1], [0, 0, 1, 1], [], []>} : vector<16x256xbf16>, vector<256x256xbf16>, vector<16x256xf32> -> vector<16x256xf32>
    %7 = arith.addf %3, %6 : vector<16x256xf32>
    %c0_6 = arith.constant 0 : index
    %c0_7 = arith.constant 0 : index
    %8 = vector.load %arg15[%c0_6, %c0_7] : memref<16x256xf32, #tpu.memory_space<vmem>>, vector<16x256xf32>
    tpu.vector_store %arg15[%c0_6, %c0_7], %7 {strides = array<i32>} : memref<16x256xf32, #tpu.memory_space<vmem>>, vector<16x256xf32>,
    %c3_i32 = arith.constant 3 : i32
    %9 = arith.cmpi eq, %arg1, %c3_i32 : i32
    %10 = arith.extui %9 : i1 to i32
    %c0_i32_8 = arith.constant 0 : i32
    %11 = arith.cmpi ne, %10, %c0_i32_8 : i32
    scf.if %11 {
      %c0_9 = arith.constant 0 : index
      %c0_10 = arith.constant 0 : index
      %12 = vector.load %arg15[%c0_9, %c0_10] : memref<16x256xf32, #tpu.memory_space<vmem>>, vector<16x256xf32>
      %c0_11 = arith.constant 0 : index
      %c0_12 = arith.constant 0 : index
      %13 = vector.load %arg4[%c0_11, %c0_12] : memref<1x256xf32, #tpu.memory_space<vmem>>, vector<1x256xf32>
      %14 = vector.broadcast %13 : vector<1x256xf32> to vector<16x256xf32>
      %15 = arith.addf %12, %14 : vector<16x256xf32>
      %cst_13 = arith.constant 0.000000e+00 : f32
      %16 = vector.broadcast %cst_13 : f32 to vector<16x256xf32>
      %17 = arith.maximumf %15, %16 : vector<16x256xf32>
      %18 = arith.truncf %17 : vector<16x256xf32> to vector<16x256xbf16>
      %c0_14 = arith.constant 0 : index
      %c0_15 = arith.constant 0 : index
      %19 = vector.load %arg5[%c0_14, %c0_15] : memref<256x128xbf16, #tpu.memory_space<vmem>>, vector<256x128xbf16>
      %cst_16 = arith.constant dense<0.000000e+00> : vector<16x128xf32>
      %20 = tpu.matmul %18, %19, %cst_16 {dimension_numbers = #tpu.dot_dimension_numbers<[1], [0], [0], [1], [0, 0, 1, 1], [], []>} : vector<16x256xbf16>, vector<256x128xbf16>, vector<16x128xf32> -> vector<16x128xf32>
      %c0_17 = arith.constant 0 : index
      %c0_18 = arith.constant 0 : index
      %21 = vector.load %arg6[%c0_17, %c0_18] : memref<1x128xf32, #tpu.memory_space<vmem>>, vector<1x128xf32>
      %22 = vector.broadcast %21 : vector<1x128xf32> to vector<16x128xf32>
      %23 = arith.addf %20, %22 : vector<16x128xf32>
      %cst_19 = arith.constant 0.000000e+00 : f32
      %24 = vector.broadcast %cst_19 : f32 to vector<16x128xf32>
      %25 = arith.maximumf %23, %24 : vector<16x128xf32>
      %26 = arith.truncf %25 : vector<16x128xf32> to vector<16x128xbf16>
      %c0_20 = arith.constant 0 : index
      %c0_21 = arith.constant 0 : index
      %27 = vector.load %arg7[%c0_20, %c0_21] : memref<128x128xbf16, #tpu.memory_space<vmem>>, vector<128x128xbf16>
      %cst_22 = arith.constant dense<0.000000e+00> : vector<16x128xf32>
      %28 = tpu.matmul %26, %27, %cst_22 {dimension_numbers = #tpu.dot_dimension_numbers<[1], [0], [0], [1], [0, 0, 1, 1], [], []>} : vector<16x128xbf16>, vector<128x128xbf16>, vector<16x128xf32> -> vector<16x128xf32>
      %c0_23 = arith.constant 0 : index
      %c0_24 = arith.constant 0 : index
      %29 = vector.load %arg8[%c0_23, %c0_24] : memref<1x128xf32, #tpu.memory_space<vmem>>, vector<1x128xf32>
      %30 = vector.broadcast %29 : vector<1x128xf32> to vector<16x128xf32>
      %31 = arith.addf %28, %30 : vector<16x128xf32>
      %c0_25 = arith.constant 0 : index
      %c0_26 = arith.constant 0 : index
      %32 = vector.load %arg11[%c0_25, %c0_26] : memref<16x128xf32, #tpu.memory_space<vmem>>, vector<16x128xf32>
      tpu.vector_store %arg11[%c0_25, %c0_26], %31 {strides = array<i32>} : memref<16x128xf32, #tpu.memory_space<vmem>>, vector<16x128xf32>,
      %c0_27 = arith.constant 0 : index
      %c0_28 = arith.constant 0 : index
      %33 = vector.load %arg9[%c0_27, %c0_28] : memref<256x128xbf16, #tpu.memory_space<vmem>>, vector<256x128xbf16>
      %cst_29 = arith.constant dense<0.000000e+00> : vector<16x128xf32>
      %34 = tpu.matmul %18, %33, %cst_29 {dimension_numbers = #tpu.dot_dimension_numbers<[1], [0], [0], [1], [0, 0, 1, 1], [], []>} : vector<16x256xbf16>, vector<256x128xbf16>, vector<16x128xf32> -> vector<16x128xf32>
      %c0_30 = arith.constant 0 : index
      %c0_31 = arith.constant 0 : index
      %35 = vector.load %arg10[%c0_30, %c0_31] : memref<1x128xf32, #tpu.memory_space<vmem>>, vector<1x128xf32>
      %36 = vector.broadcast %35 : vector<1x128xf32> to vector<16x128xf32>
      %37 = arith.addf %34, %36 : vector<16x128xf32>
      %c0_32 = arith.constant 0 : index
      %c0_33 = arith.constant 0 : index
      %38 = vector.load %arg12[%c0_32, %c0_33] : memref<16x128xf32, #tpu.memory_space<vmem>>, vector<16x128xf32>
      tpu.vector_store %arg12[%c0_32, %c0_33], %37 {strides = array<i32>} : memref<16x128xf32, #tpu.memory_space<vmem>>, vector<16x128xf32>,
      %c0_34 = arith.constant 0 : index
      %c0_35 = arith.constant 0 : index
      %39 = vector.load %arg13[%c0_34, %c0_35] : memref<16x256xf32, #tpu.memory_space<vmem>>, vector<16x256xf32>
      tpu.vector_store %arg13[%c0_34, %c0_35], %17 {strides = array<i32>} : memref<16x256xf32, #tpu.memory_space<vmem>>, vector<16x256xf32>,
      %c0_36 = arith.constant 0 : index
      %c0_37 = arith.constant 0 : index
      %40 = vector.load %arg14[%c0_36, %c0_37] : memref<16x128xf32, #tpu.memory_space<vmem>>, vector<16x128xf32>
      tpu.vector_store %arg14[%c0_36, %c0_37], %25 {strides = array<i32>} : memref<16x128xf32, #tpu.memory_space<vmem>>, vector<16x128xf32>,
    } else {
    }
    return
  }
  func.func @transform_0(%arg0: i32, %arg1: i32) -> (i32, i32) {
    %c0_i32 = arith.constant 0 : i32
    return %arg0, %arg1 : i32, i32
  }
  func.func @transform_1(%arg0: i32, %arg1: i32) -> (i32, i32) {
    %c0_i32 = arith.constant 0 : i32
    %c0_i32_0 = arith.constant 0 : i32
    return %arg1, %c0_i32 : i32, i32
  }
  func.func @transform_2(%arg0: i32, %arg1: i32) -> (i32, i32) {
    %c0_i32 = arith.constant 0 : i32
    %c0_i32_0 = arith.constant 0 : i32
    %c0_i32_1 = arith.constant 0 : i32
    return %c0_i32, %c0_i32_0 : i32, i32
  }
  func.func @transform_3(%arg0: i32, %arg1: i32) -> (i32, i32) {
    %c0_i32 = arith.constant 0 : i32
    %c0_i32_0 = arith.constant 0 : i32
    %c0_i32_1 = arith.constant 0 : i32
    return %c0_i32, %c0_i32_0 : i32, i32
  }
  func.func @transform_4(%arg0: i32, %arg1: i32) -> (i32, i32) {
    %c0_i32 = arith.constant 0 : i32
    %c0_i32_0 = arith.constant 0 : i32
    %c0_i32_1 = arith.constant 0 : i32
    return %c0_i32, %c0_i32_0 : i32, i32
  }
  func.func @transform_5(%arg0: i32, %arg1: i32) -> (i32, i32) {
    %c0_i32 = arith.constant 0 : i32
    %c0_i32_0 = arith.constant 0 : i32
    %c0_i32_1 = arith.constant 0 : i32
    return %c0_i32, %c0_i32_0 : i32, i32
  }
  func.func @transform_6(%arg0: i32, %arg1: i32) -> (i32, i32) {
    %c0_i32 = arith.constant 0 : i32
    %c0_i32_0 = arith.constant 0 : i32
    %c0_i32_1 = arith.constant 0 : i32
    return %c0_i32, %c0_i32_0 : i32, i32
  }
  func.func @transform_7(%arg0: i32, %arg1: i32) -> (i32, i32) {
    %c0_i32 = arith.constant 0 : i32
    %c0_i32_0 = arith.constant 0 : i32
    %c0_i32_1 = arith.constant 0 : i32
    return %c0_i32, %c0_i32_0 : i32, i32
  }
  func.func @transform_8(%arg0: i32, %arg1: i32) -> (i32, i32) {
    %c0_i32 = arith.constant 0 : i32
    %c0_i32_0 = arith.constant 0 : i32
    %c0_i32_1 = arith.constant 0 : i32
    return %c0_i32, %c0_i32_0 : i32, i32
  }
  func.func @transform_9(%arg0: i32, %arg1: i32) -> (i32, i32) {
    %c0_i32 = arith.constant 0 : i32
    %c0_i32_0 = arith.constant 0 : i32
    return %arg0, %c0_i32 : i32, i32
  }
  func.func @transform_10(%arg0: i32, %arg1: i32) -> (i32, i32) {
    %c0_i32 = arith.constant 0 : i32
    %c0_i32_0 = arith.constant 0 : i32
    return %arg0, %c0_i32 : i32, i32
  }
  func.func @transform_11(%arg0: i32, %arg1: i32) -> (i32, i32) {
    %c0_i32 = arith.constant 0 : i32
    %c0_i32_0 = arith.constant 0 : i32
    return %arg0, %c0_i32 : i32, i32
  }
  func.func @transform_12(%arg0: i32, %arg1: i32) -> (i32, i32) {
    %c0_i32 = arith.constant 0 : i32
    %c0_i32_0 = arith.constant 0 : i32
    return %arg0, %c0_i32 : i32, i32
  }
}

</mosaic_0001>

<llo_original>
// kernel: tpu_custom_call.1
$region0: #{tpu_custom_call.1}
  #allocation0 [shape = 'u32[]', space=smem, size = 0x4, offset = 0x4, fixed_abs, tag = 'smem constant byte address 0x4 - core index']
  #allocation1 [shape = 'u32[144,128]{1,0:T(1,128)}', space=vmem, size = 0x12000, scoped, tag = 'internal scratch']
  #allocation2 [shape = 'f32[16,256]{1,0:T(8,128)}', space=vmem, size = 0x4000, scoped, tag = 'scratch operand']
  %s0 = inlined_call_operand.hbm [shape: bf16[32,1024], index: 0, kind: input, shape index: {}]
  %s1 = inlined_call_operand.hbm [shape: bf16[1024,256], index: 1, kind: input, shape index: {}]
  %s2 = inlined_call_operand.vmem [shape: f32[1,256], index: 2, kind: input, shape index: {}]
  %s3 = inlined_call_operand.hbm [shape: bf16[256,128], index: 3, kind: input, shape index: {}]
  %s4 = inlined_call_operand.vmem [shape: f32[1,128], index: 4, kind: input, shape index: {}]
  %s5 = inlined_call_operand.hbm [shape: bf16[128,128], index: 5, kind: input, shape index: {}]
  %s6 = inlined_call_operand.vmem [shape: f32[1,128], index: 6, kind: input, shape index: {}]
  %s7 = inlined_call_operand.hbm [shape: bf16[256,128], index: 7, kind: input, shape index: {}]
  %s8 = inlined_call_operand.vmem [shape: f32[1,128], index: 8, kind: input, shape index: {}]
  %s9 = inlined_call_operand.hbm [shape: f32[32,128], index: 9, kind: output, shape index: {0}]
  %s10 = inlined_call_operand.hbm [shape: f32[32,128], index: 10, kind: output, shape index: {1}]
  %s11 = inlined_call_operand.hbm [shape: f32[32,256], index: 11, kind: output, shape index: {2}]
  %s12 = inlined_call_operand.hbm [shape: f32[32,128], index: 12, kind: output, shape index: {3}]
  %13 = xla_tuple %s9, %s10, %s11, %s12
  %s14 = sld [smem:[#allocation0]]
  $region121: #{tpu_custom_call.1} parent=0
    _
  %s16 = ssub.s32 1, %s14
  %s17 = scalar_select 0, %s16, %s14
  $region1: #{tpu_custom_call.1} parent=0
    #allocation3 [shape = 'u8[16384]{0}', space=vmem, size = 0x4000, scoped, tag = 'input window, operand 0']
    #allocation4 [shape = 's32[2]{0}', space=sflag, size = 0x8, scoped, tag = 'scoped memory for tpu_custom_call.1']
    #allocation5 [shape = 's32[2]{0}', space=sflag, size = 0x8, scoped, tag = 'scoped memory for tpu_custom_call.1']
    #allocation6 [shape = 'u8[262144]{0}', space=vmem, size = 0x40000, scoped, tag = 'input window, operand 1']
    #allocation7 [shape = 's32[2]{0}', space=sflag, size = 0x8, scoped, tag = 'scoped memory for tpu_custom_call.1']
    #allocation8 [shape = 'u8[65536]{0}', space=vmem, size = 0x10000, scoped, tag = 'input window, operand 3, single buffered']
    #allocation9 [shape = 'u8[32768]{0}', space=vmem, size = 0x8000, scoped, tag = 'input window, operand 5, single buffered']
    #allocation10 [shape = 's32[1]{0}', space=sflag, size = 0x4, scoped, tag = 'scoped memory for tpu_custom_call.1']
    #allocation11 [shape = 'u8[65536]{0}', space=vmem, size = 0x10000, scoped, tag = 'input window, operand 7, single buffered']
    #allocation12 [shape = 'u8[16384]{0}', space=vmem, size = 0x4000, scoped, tag = 'output window, operand 0']
    #allocation13 [shape = 'u8[16384]{0}', space=vmem, size = 0x4000, scoped, tag = 'output window, operand 1']
    #allocation14 [shape = 's32[2]{0}', space=sflag, size = 0x8, scoped, tag = 'scoped memory for tpu_custom_call.1']
    #allocation15 [shape = 'u8[32768]{0}', space=vmem, size = 0x8000, scoped, tag = 'output window, operand 2']
    #allocation16 [shape = 'u8[16384]{0}', space=vmem, size = 0x4000, scoped, tag = 'output window, operand 3']
    #allocation17 [shape = 's32[2]{0}', space=sflag, size = 0x8, scoped, tag = 'scoped memory for tpu_custom_call.1']
    %18 = vsyncpa [#allocation4], 0
    %s19 = scalar_lea.sflag [#allocation4], 1
    %20 = vsyncpa %s19, 0
    %21 = vsyncpa [#allocation7], 0
    %s22 = scalar_lea.sflag [#allocation7], 1
    %23 = vsyncpa %s22, 0
    %24 = vsyncpa [#allocation10], 0
    %25 = vsyncpa [#allocation5], 0
    %s26 = scalar_lea.sflag [#allocation5], 1
    %27 = vsyncpa %s26, 0
    %28 = vsyncpa [#allocation14], 0
    %s29 = scalar_lea.sflag [#allocation14], 1
    %30 = vsyncpa %s29, 0
    %31 = vsyncpa [#allocation17], 0
    %s32 = scalar_lea.sflag [#allocation17], 1
    %33 = vsyncpa %s32, 0
    loop: start=0, step=1, limit=10
    $region2: #{tpu_custom_call.1} parent=1 // loop_pre_header
      _
    $region3: #{tpu_custom_call.1} parent=1 // loop_header
      %s35 = sphi 0, %s39
      %p36 = scmp.ge.s32.totalorder %s35, 10
      %s42 = sphi 0, %s54
      %s43 = sphi 0, %s50
      %s44 = sphi 0, %s42
      %s45 = sphi 0, %s43
      %s46 = sphi 0, %s44
      %s47 = sphi 0, %s45
      %s59 = sphi 0, %s61
      %s62 = sphi 0, %s59
      %s63 = sphi 0, %s62
      %s79 = sphi 0, %s63
      %s85 = sphi 0, %s87
      %s88 = sphi 0, %s85
      %s89 = sphi 0, %s88
      %s105 = sphi 0, %s89
      %s109 = sphi 0, %s109
      %s111 = sphi 0, %s109
      %s112 = sphi 0, %s111
      %s126 = sphi 0, %s112
      %s130 = sphi 0, %s130
      %s132 = sphi 0, %s130
      %s133 = sphi 0, %s132
      %s147 = sphi 0, %s133
      %s151 = sphi 0, %s151
      %s153 = sphi 0, %s151
      %s154 = sphi 0, %s153
      %s168 = sphi 0, %s154
      %s172 = sphi 0, %s172
      %s174 = sphi 0, %s172
      %s175 = sphi 0, %s174
      %s189 = sphi 0, %s175
      %s193 = sphi 0, %s193
      %s195 = sphi 0, %s193
      %s196 = sphi 0, %s195
      %s210 = sphi 0, %s196
      %s214 = sphi 0, %s214
      %s216 = sphi 0, %s214
      %s217 = sphi 0, %s216
      %s231 = sphi 0, %s217
      %s235 = sphi 0, %s235
      %s237 = sphi 0, %s235
      %s238 = sphi 0, %s237
      %s252 = sphi 0, %s238
      %s258 = sphi 0, %s260
      %s261 = sphi 0, %s258
      %s262 = sphi 0, %s261
      %s278 = sphi 0, %s262
      %s284 = sphi 0, %s286
      %s287 = sphi 0, %s284
      %s288 = sphi 0, %s287
      %s304 = sphi 0, %s288
      %s310 = sphi 0, %s312
      %s313 = sphi 0, %s310
      %s314 = sphi 0, %s313
      %s330 = sphi 0, %s314
      %s336 = sphi 0, %s338
      %s339 = sphi 0, %s336
      %s340 = sphi 0, %s339
      %s356 = sphi 0, %s340
    $region4: #{tpu_custom_call.1} parent=1 // loop_header_branch
      %38 = sbr.rel (%p36) target = $region8
    $region5: #{tpu_custom_call.1} parent=1 // loop_body
      %s40 = ssub.s32 %s35, 1
      %s41 = ssub.s32 %s35, 2
      %s48 = sadd.s32 1, %s43
      %p49 = scmp.ge.s32.totalorder %s48, 4
      %s50 = scalar_select %p49, 0, %s48
      %s51 = sadd.s32 1, %s42
      %s52 = scalar_select %p49, %s51, %s42
      %p53 = scmp.ge.s32.totalorder %s52, 2
      %s54 = scalar_select %p53, 0, %s52
      %s55 = ssub.s32 %s42, %s54
      %s56 = ssub.s32 %s43, %s50
      %s57 = sor.u32 %s55, %s56
      %p58 = scmp.eq.s32.totalorder %s57, 0
      %s60 = sadd.s32 %s59, 1
      %s61 = scalar_select %p58, %s59, %s60
      %p64 = pneg %p58
      %p65 = scmp.eq.s32.totalorder %s35, 7
      %p66 = por %p64, %p65
      %p67 = scmp.ne.s32.totalorder %s59, %s62
      %p68 = scmp.eq.s32.totalorder %s35, 0
      %p69 = por %p67, %p68
      %p70 = scmp.ne.s32.totalorder %s59, %s62
      %p71 = scmp.eq.s32.totalorder %s40, 7
      %p72 = por %p70, %p71
      %p73 = scmp.ne.s32.totalorder %s62, %s63
      %p74 = scmp.eq.s32.totalorder %s40, 0
      %p75 = por %p73, %p74
      %p76 = scmp.ne.s32.totalorder %s62, %s63
      %p77 = scmp.eq.s32.totalorder %s41, 7
      %p78 = por %p76, %p77
      %p80 = scmp.ne.s32.totalorder %s63, %s79
      %p81 = scmp.eq.s32.totalorder %s41, 0
      %p82 = por %p80, %p81
      %s83 = ssub.s32 %s43, %s50
      %p84 = scmp.eq.s32.totalorder %s83, 0
      %s86 = sadd.s32 %s85, 1
      %s87 = scalar_select %p84, %s85, %s86
      %p90 = pneg %p84
      %p91 = scmp.eq.s32.totalorder %s35, 7
      %p92 = por %p90, %p91
      %p93 = scmp.ne.s32.totalorder %s85, %s88
      %p94 = scmp.eq.s32.totalorder %s35, 0
      %p95 = por %p93, %p94
      %p96 = scmp.ne.s32.totalorder %s85, %s88
      %p97 = scmp.eq.s32.totalorder %s40, 7
      %p98 = por %p96, %p97
      %p99 = scmp.ne.s32.totalorder %s88, %s89
      %p100 = scmp.eq.s32.totalorder %s40, 0
      %p101 = por %p99, %p100
      %p102 = scmp.ne.s32.totalorder %s88, %s89
      %p103 = scmp.eq.s32.totalorder %s41, 7
      %p104 = por %p102, %p103
      %p106 = scmp.ne.s32.totalorder %s89, %s105
      %p107 = scmp.eq.s32.totalorder %s41, 0
      %p108 = por %p106, %p107
      %s110 = sadd.s32 %s109, 1
      %p113 = scmp.eq.s32.totalorder %s35, 7
      %p114 = scmp.ne.s32.totalorder %s109, %s111
      %p115 = scmp.eq.s32.totalorder %s35, 0
      %p116 = por %p114, %p115
      %p117 = scmp.ne.s32.totalorder %s109, %s111
      %p118 = scmp.eq.s32.totalorder %s40, 7
      %p119 = por %p117, %p118
      %p120 = scmp.ne.s32.totalorder %s111, %s112
      %p121 = scmp.eq.s32.totalorder %s40, 0
      %p122 = por %p120, %p121
      %p123 = scmp.ne.s32.totalorder %s111, %s112
      %p124 = scmp.eq.s32.totalorder %s41, 7
      %p125 = por %p123, %p124
      %p127 = scmp.ne.s32.totalorder %s112, %s126
      %p128 = scmp.eq.s32.totalorder %s41, 0
      %p129 = por %p127, %p128
      %s131 = sadd.s32 %s130, 1
      %p134 = scmp.eq.s32.totalorder %s35, 7
      %p135 = scmp.ne.s32.totalorder %s130, %s132
      %p136 = scmp.eq.s32.totalorder %s35, 0
      %p137 = por %p135, %p136
      %p138 = scmp.ne.s32.totalorder %s130, %s132
      %p139 = scmp.eq.s32.totalorder %s40, 7
      %p140 = por %p138, %p139
      %p141 = scmp.ne.s32.totalorder %s132, %s133
      %p142 = scmp.eq.s32.totalorder %s40, 0
      %p143 = por %p141, %p142
      %p144 = scmp.ne.s32.totalorder %s132, %s133
      %p145 = scmp.eq.s32.totalorder %s41, 7
      %p146 = por %p144, %p145
      %p148 = scmp.ne.s32.totalorder %s133, %s147
      %p149 = scmp.eq.s32.totalorder %s41, 0
      %p150 = por %p148, %p149
      %s152 = sadd.s32 %s151, 1
      %p155 = scmp.eq.s32.totalorder %s35, 7
      %p156 = scmp.ne.s32.totalorder %s151, %s153
      %p157 = scmp.eq.s32.totalorder %s35, 0
      %p158 = por %p156, %p157
      %p159 = scmp.ne.s32.totalorder %s151, %s153
      %p160 = scmp.eq.s32.totalorder %s40, 7
      %p161 = por %p159, %p160
      %p162 = scmp.ne.s32.totalorder %s153, %s154
      %p163 = scmp.eq.s32.totalorder %s40, 0
      %p164 = por %p162, %p163
      %p165 = scmp.ne.s32.totalorder %s153, %s154
      %p166 = scmp.eq.s32.totalorder %s41, 7
      %p167 = por %p165, %p166
      %p169 = scmp.ne.s32.totalorder %s154, %s168
      %p170 = scmp.eq.s32.totalorder %s41, 0
      %p171 = por %p169, %p170
      %s173 = sadd.s32 %s172, 1
      %p176 = scmp.eq.s32.totalorder %s35, 7
      %p177 = scmp.ne.s32.totalorder %s172, %s174
      %p178 = scmp.eq.s32.totalorder %s35, 0
      %p179 = por %p177, %p178
      %p180 = scmp.ne.s32.totalorder %s172, %s174
      %p181 = scmp.eq.s32.totalorder %s40, 7
      %p182 = por %p180, %p181
      %p183 = scmp.ne.s32.totalorder %s174, %s175
      %p184 = scmp.eq.s32.totalorder %s40, 0
      %p185 = por %p183, %p184
      %p186 = scmp.ne.s32.totalorder %s174, %s175
      %p187 = scmp.eq.s32.totalorder %s41, 7
      %p188 = por %p186, %p187
      %p190 = scmp.ne.s32.totalorder %s175, %s189
      %p191 = scmp.eq.s32.totalorder %s41, 0
      %p192 = por %p190, %p191
      %s194 = sadd.s32 %s193, 1
      %p197 = scmp.eq.s32.totalorder %s35, 7
      %p198 = scmp.ne.s32.totalorder %s193, %s195
      %p199 = scmp.eq.s32.totalorder %s35, 0
      %p200 = por %p198, %p199
      %p201 = scmp.ne.s32.totalorder %s193, %s195
      %p202 = scmp.eq.s32.totalorder %s40, 7
      %p203 = por %p201, %p202
      %p204 = scmp.ne.s32.totalorder %s195, %s196
      %p205 = scmp.eq.s32.totalorder %s40, 0
      %p206 = por %p204, %p205
      %p207 = scmp.ne.s32.totalorder %s195, %s196
      %p208 = scmp.eq.s32.totalorder %s41, 7
      %p209 = por %p207, %p208
      %p211 = scmp.ne.s32.totalorder %s196, %s210
      %p212 = scmp.eq.s32.totalorder %s41, 0
      %p213 = por %p211, %p212
      %s215 = sadd.s32 %s214, 1
      %p218 = scmp.eq.s32.totalorder %s35, 7
      %p219 = scmp.ne.s32.totalorder %s214, %s216
      %p220 = scmp.eq.s32.totalorder %s35, 0
      %p221 = por %p219, %p220
      %p222 = scmp.ne.s32.totalorder %s214, %s216
      %p223 = scmp.eq.s32.totalorder %s40, 7
      %p224 = por %p222, %p223
      %p225 = scmp.ne.s32.totalorder %s216, %s217
      %p226 = scmp.eq.s32.totalorder %s40, 0
      %p227 = por %p225, %p226
      %p228 = scmp.ne.s32.totalorder %s216, %s217
      %p229 = scmp.eq.s32.totalorder %s41, 7
      %p230 = por %p228, %p229
      %p232 = scmp.ne.s32.totalorder %s217, %s231
      %p233 = scmp.eq.s32.totalorder %s41, 0
      %p234 = por %p232, %p233
      %s236 = sadd.s32 %s235, 1
      %p239 = scmp.eq.s32.totalorder %s35, 7
      %p240 = scmp.ne.s32.totalorder %s235, %s237
      %p241 = scmp.eq.s32.totalorder %s35, 0
      %p242 = por %p240, %p241
      %p243 = scmp.ne.s32.totalorder %s235, %s237
      %p244 = scmp.eq.s32.totalorder %s40, 7
      %p245 = por %p243, %p244
      %p246 = scmp.ne.s32.totalorder %s237, %s238
      %p247 = scmp.eq.s32.totalorder %s40, 0
      %p248 = por %p246, %p247
      %p249 = scmp.ne.s32.totalorder %s237, %s238
      %p250 = scmp.eq.s32.totalorder %s41, 7
      %p251 = por %p249, %p250
      %p253 = scmp.ne.s32.totalorder %s238, %s252
      %p254 = scmp.eq.s32.totalorder %s41, 0
      %p255 = por %p253, %p254
      %s256 = ssub.s32 %s42, %s54
      %p257 = scmp.eq.s32.totalorder %s256, 0
      %s259 = sadd.s32 %s258, 1
      %s260 = scalar_select %p257, %s258, %s259
      %p263 = pneg %p257
      %p264 = scmp.eq.s32.totalorder %s35, 7
      %p265 = por %p263, %p264
      %p266 = scmp.ne.s32.totalorder %s258, %s261
      %p267 = scmp.eq.s32.totalorder %s35, 0
      %p268 = por %p266, %p267
      %p269 = scmp.ne.s32.totalorder %s258, %s261
      %p270 = scmp.eq.s32.totalorder %s40, 7
      %p271 = por %p269, %p270
      %p272 = scmp.ne.s32.totalorder %s261, %s262
      %p273 = scmp.eq.s32.totalorder %s40, 0
      %p274 = por %p272, %p273
      %p275 = scmp.ne.s32.totalorder %s261, %s262
      %p276 = scmp.eq.s32.totalorder %s41, 7
      %p277 = por %p275, %p276
      %p279 = scmp.ne.s32.totalorder %s262, %s278
      %p280 = scmp.eq.s32.totalorder %s41, 0
      %p281 = por %p279, %p280
      %s282 = ssub.s32 %s42, %s54
      %p283 = scmp.eq.s32.totalorder %s282, 0
      %s285 = sadd.s32 %s284, 1
      %s286 = scalar_select %p283, %s284, %s285
      %p289 = pneg %p283
      %p290 = scmp.eq.s32.totalorder %s35, 7
      %p291 = por %p289, %p290
      %p292 = scmp.ne.s32.totalorder %s284, %s287
      %p293 = scmp.eq.s32.totalorder %s35, 0
      %p294 = por %p292, %p293
      %p295 = scmp.ne.s32.totalorder %s284, %s287
      %p296 = scmp.eq.s32.totalorder %s40, 7
      %p297 = por %p295, %p296
      %p298 = scmp.ne.s32.totalorder %s287, %s288
      %p299 = scmp.eq.s32.totalorder %s40, 0
      %p300 = por %p298, %p299
      %p301 = scmp.ne.s32.totalorder %s287, %s288
      %p302 = scmp.eq.s32.totalorder %s41, 7
      %p303 = por %p301, %p302
      %p305 = scmp.ne.s32.totalorder %s288, %s304
      %p306 = scmp.eq.s32.totalorder %s41, 0
      %p307 = por %p305, %p306
      %s308 = ssub.s32 %s42, %s54
      %p309 = scmp.eq.s32.totalorder %s308, 0
      %s311 = sadd.s32 %s310, 1
      %s312 = scalar_select %p309, %s310, %s311
      %p315 = pneg %p309
      %p316 = scmp.eq.s32.totalorder %s35, 7
      %p317 = por %p315, %p316
      %p318 = scmp.ne.s32.totalorder %s310, %s313
      %p319 = scmp.eq.s32.totalorder %s35, 0
      %p320 = por %p318, %p319
      %p321 = scmp.ne.s32.totalorder %s310, %s313
      %p322 = scmp.eq.s32.totalorder %s40, 7
      %p323 = por %p321, %p322
      %p324 = scmp.ne.s32.totalorder %s313, %s314
      %p325 = scmp.eq.s32.totalorder %s40, 0
      %p326 = por %p324, %p325
      %p327 = scmp.ne.s32.totalorder %s313, %s314
      %p328 = scmp.eq.s32.totalorder %s41, 7
      %p329 = por %p327, %p328
      %p331 = scmp.ne.s32.totalorder %s314, %s330
      %p332 = scmp.eq.s32.totalorder %s41, 0
      %p333 = por %p331, %p332
      %s334 = ssub.s32 %s42, %s54
      %p335 = scmp.eq.s32.totalorder %s334, 0
      %s337 = sadd.s32 %s336, 1
      %s338 = scalar_select %p335, %s336, %s337
      %p341 = pneg %p335
      %p342 = scmp.eq.s32.totalorder %s35, 7
      %p343 = por %p341, %p342
      %p344 = scmp.ne.s32.totalorder %s336, %s339
      %p345 = scmp.eq.s32.totalorder %s35, 0
      %p346 = por %p344, %p345
      %p347 = scmp.ne.s32.totalorder %s336, %s339
      %p348 = scmp.eq.s32.totalorder %s40, 7
      %p349 = por %p347, %p348
      %p350 = scmp.ne.s32.totalorder %s339, %s340
      %p351 = scmp.eq.s32.totalorder %s40, 0
      %p352 = por %p350, %p351
      %p353 = scmp.ne.s32.totalorder %s339, %s340
      %p354 = scmp.eq.s32.totalorder %s41, 7
      %p355 = por %p353, %p354
      %p357 = scmp.ne.s32.totalorder %s340, %s356
      %p358 = scmp.eq.s32.totalorder %s41, 0
      %p359 = por %p357, %p358
      %p360 = scmp.le.s32.totalorder 1, %s35
      %p361 = scmp.lt.s32.totalorder %s35, 9
      %p362 = pnand %p360, %p361
      %p363 = pneg %p362
      // Predicated region
      $region9: #{tpu_custom_call.1} parent=5 // pred_check
        _
      $region10: #{tpu_custom_call.1} parent=5 // pred_check_branch
        %365 = sbr.rel (%p362) target = $region12
      $region11: #{tpu_custom_call.1} parent=5 // pred_region
        %s366 = ssub.s32 %s35, 1
        // Predicated region
        $region13: #{tpu_custom_call.1} parent=11 // pred_check
          %p367 = pneg %p122
        $region14: #{tpu_custom_call.1} parent=11 // pred_check_branch
          %369 = sbr.rel (%p367) target = $region16
        $region15: #{tpu_custom_call.1} parent=11 // pred_region
          _
        $region16: #{tpu_custom_call.1} parent=11 // pred_fallthru
          _
        // Predicated region
        $region17: #{tpu_custom_call.1} parent=11 // pred_check
          %p370 = pneg %p143
        $region18: #{tpu_custom_call.1} parent=11 // pred_check_branch
          %372 = sbr.rel (%p370) target = $region20
        $region19: #{tpu_custom_call.1} parent=11 // pred_region
          %s374 = ssub.s32 2048, 2048
          %375 = vsyncadd [#allocation7], %s374
          %s376 = sshll.u32 [#allocation8], 4
          %s377 = int_to_ptr.vmem [resolvable:$true] %s376
          %382 = dma.hbm_to_vmem [thread:$0]  %s3, 2048, %s377, [#allocation7], 64, 64, 4
        $region20: #{tpu_custom_call.1} parent=11 // pred_fallthru
          _
        // Predicated region
        $region21: #{tpu_custom_call.1} parent=11 // pred_check
          %p383 = pneg %p164
        $region22: #{tpu_custom_call.1} parent=11 // pred_check_branch
          %385 = sbr.rel (%p383) target = $region24
        $region23: #{tpu_custom_call.1} parent=11 // pred_region
          _
        $region24: #{tpu_custom_call.1} parent=11 // pred_fallthru
          _
        // Predicated region
        $region25: #{tpu_custom_call.1} parent=11 // pred_check
          %p386 = pneg %p185
        $region26: #{tpu_custom_call.1} parent=11 // pred_check_branch
          %388 = sbr.rel (%p386) target = $region28
        $region27: #{tpu_custom_call.1} parent=11 // pred_region
          %s390 = ssub.s32 1024, 1024
          %391 = vsyncadd [#allocation10], %s390
          %s392 = sshll.u32 [#allocation9], 4
          %s393 = int_to_ptr.vmem [resolvable:$true] %s392
          %398 = dma.hbm_to_vmem [thread:$0]  %s5, 1024, %s393, [#allocation10], 64, 64, 4
        $region28: #{tpu_custom_call.1} parent=11 // pred_fallthru
          _
        // Predicated region
        $region29: #{tpu_custom_call.1} parent=11 // pred_check
          %p399 = pneg %p206
        $region30: #{tpu_custom_call.1} parent=11 // pred_check_branch
          %401 = sbr.rel (%p399) target = $region32
        $region31: #{tpu_custom_call.1} parent=11 // pred_region
          _
        $region32: #{tpu_custom_call.1} parent=11 // pred_fallthru
          _
        // Predicated region
        $region33: #{tpu_custom_call.1} parent=11 // pred_check
          %p402 = pneg %p227
        $region34: #{tpu_custom_call.1} parent=11 // pred_check_branch
          %404 = sbr.rel (%p402) target = $region36
        $region35: #{tpu_custom_call.1} parent=11 // pred_region
          %s406 = ssub.s32 2048, 2048
          %407 = vsyncadd [#allocation10], %s406
          %s408 = sshll.u32 [#allocation11], 4
          %s409 = int_to_ptr.vmem [resolvable:$true] %s408
          %414 = dma.hbm_to_vmem [thread:$0]  %s7, 2048, %s409, [#allocation10], 64, 64, 4
        $region36: #{tpu_custom_call.1} parent=11 // pred_fallthru
          _
        // Predicated region
        $region37: #{tpu_custom_call.1} parent=11 // pred_check
          %p415 = pneg %p248
        $region38: #{tpu_custom_call.1} parent=11 // pred_check_branch
          %417 = sbr.rel (%p415) target = $region40
        $region39: #{tpu_custom_call.1} parent=11 // pred_region
          _
        $region40: #{tpu_custom_call.1} parent=11 // pred_fallthru
          _
      $region12: #{tpu_custom_call.1} parent=5 // pred_fallthru
        _
      %p418 = scmp.lt.s32.totalorder %s35, 8
      // Predicated region
      $region41: #{tpu_custom_call.1} parent=5 // pred_check
        %p419 = pneg %p418
      $region42: #{tpu_custom_call.1} parent=5 // pred_check_branch
        %421 = sbr.rel (%p419) target = $region44
      $region43: #{tpu_custom_call.1} parent=5 // pred_region
        // Predicated region
        $region45: #{tpu_custom_call.1} parent=43 // pred_check
          %p422 = pneg %p69
        $region46: #{tpu_custom_call.1} parent=43 // pred_check_branch
          %424 = sbr.rel (%p422) target = $region48
        $region47: #{tpu_custom_call.1} parent=43 // pred_region
          %s425 = sand.u32 %s59, 1
          %s426 = scalar_lea.sflag [#allocation4], %s425
          %s427 = sand.u32 %s59, 1
          %s428 = smul.addr %s427, 16
          %s429 = scalar_lea.vmem [#allocation3], %s428
          %s430 = smul.u32 2, %s42
          %s431 = smul.u32 2, %s43
          %s433 = ssub.s32 256, 256
          %434 = vsyncadd %s426, %s433
          %s435 = smul.addr %s430, 8
          %s436 = sadd.s32 %s431, %s435
          %s437 = smul.addr %s436, 64
          %s438 = scalar_lea.hbm %s0, %s437
          %s439 = sshll.u32 %s429, 4
          %s440 = int_to_ptr.vmem [resolvable:$true] %s439
          %445 = dma.hbm_to_vmem [thread:$0]  %s438, 256, %s440, %s426, 512, 128, 8
        $region48: #{tpu_custom_call.1} parent=43 // pred_fallthru
          _
        // Predicated region
        $region49: #{tpu_custom_call.1} parent=43 // pred_check
          %p446 = pneg %p95
        $region50: #{tpu_custom_call.1} parent=43 // pred_check_branch
          %448 = sbr.rel (%p446) target = $region52
        $region51: #{tpu_custom_call.1} parent=43 // pred_region
          %s449 = sand.u32 %s35, 1
          %s450 = scalar_lea.sflag [#allocation7], %s449
          %s451 = sand.u32 %s85, 1
          %s452 = smul.addr %s451, 256
          %s453 = scalar_lea.vmem [#allocation6], %s452
          %s454 = smul.u32 32, %s43
          %s456 = ssub.s32 4096, 4096
          %457 = vsyncadd %s450, %s456
          %s458 = smul.addr %s454, 2
          %s459 = smul.addr %s458, 64
          %s460 = scalar_lea.hbm %s1, %s459
          %s461 = sshll.u32 %s453, 4
          %s462 = int_to_ptr.vmem [resolvable:$true] %s461
          %467 = dma.hbm_to_vmem [thread:$0]  %s460, 4096, %s462, %s450, 128, 128, 8
        $region52: #{tpu_custom_call.1} parent=43 // pred_fallthru
          _
      $region44: #{tpu_custom_call.1} parent=5 // pred_fallthru
        _
      %p468 = scmp.le.s32.totalorder 1, %s35
      %p469 = scmp.lt.s32.totalorder %s35, 9
      %p470 = pnand %p468, %p469
      %p471 = pneg %p470
      // Predicated region
      $region53: #{tpu_custom_call.1} parent=5 // pred_check
        _
      $region54: #{tpu_custom_call.1} parent=5 // pred_check_branch
        %473 = sbr.rel (%p470) target = $region56
      $region55: #{tpu_custom_call.1} parent=5 // pred_region
        %s474 = ssub.s32 %s35, 1
        %s475 = sand.u32 %s62, 1
        %s476 = scalar_lea.sflag [#allocation4], %s475
        %s477 = sand.u32 %s62, 1
        %s478 = smul.addr %s477, 16
        %s479 = scalar_lea.vmem [#allocation3], %s478
        // Predicated region
        $region57: #{tpu_custom_call.1} parent=55 // pred_check
          %p480 = pneg %p75
        $region58: #{tpu_custom_call.1} parent=55 // pred_check_branch
          %482 = sbr.rel (%p480) target = $region60
        $region59: #{tpu_custom_call.1} parent=55 // pred_region
          %483 = dma.done %s476, 256
        $region60: #{tpu_custom_call.1} parent=55 // pred_fallthru
          _
        %s484 = sand.u32 %s40, 1
        %s485 = scalar_lea.sflag [#allocation7], %s484
        %s486 = sand.u32 %s88, 1
        %s487 = smul.addr %s486, 256
        %s488 = scalar_lea.vmem [#allocation6], %s487
        // Predicated region
        $region61: #{tpu_custom_call.1} parent=55 // pred_check
          %p489 = pneg %p101
        $region62: #{tpu_custom_call.1} parent=55 // pred_check_branch
          %491 = sbr.rel (%p489) target = $region64
        $region63: #{tpu_custom_call.1} parent=55 // pred_region
          %492 = dma.done %s485, 4096
        $region64: #{tpu_custom_call.1} parent=55 // pred_fallthru
          _
        // Predicated region
        $region65: #{tpu_custom_call.1} parent=55 // pred_check
          %p493 = pneg %p143
        $region66: #{tpu_custom_call.1} parent=55 // pred_check_branch
          %495 = sbr.rel (%p493) target = $region68
        $region67: #{tpu_custom_call.1} parent=55 // pred_region
          %496 = dma.done [#allocation7], 2048
        $region68: #{tpu_custom_call.1} parent=55 // pred_fallthru
          _
        // Predicated region
        $region69: #{tpu_custom_call.1} parent=55 // pred_check
          %p497 = pneg %p185
        $region70: #{tpu_custom_call.1} parent=55 // pred_check_branch
          %499 = sbr.rel (%p497) target = $region72
        $region71: #{tpu_custom_call.1} parent=55 // pred_region
          %500 = dma.done [#allocation10], 1024
        $region72: #{tpu_custom_call.1} parent=55 // pred_fallthru
          _
        // Predicated region
        $region73: #{tpu_custom_call.1} parent=55 // pred_check
          %p501 = pneg %p227
        $region74: #{tpu_custom_call.1} parent=55 // pred_check_branch
          %503 = sbr.rel (%p501) target = $region76
        $region75: #{tpu_custom_call.1} parent=55 // pred_region
          %504 = dma.done [#allocation10], 2048
        $region76: #{tpu_custom_call.1} parent=55 // pred_fallthru
          _
        %s505 = sand.u32 %s62, 1
        %s506 = scalar_lea.sflag [#allocation4], %s505
        %s507 = sand.u32 %s62, 1
        %s508 = smul.addr %s507, 16
        %s509 = scalar_lea.vmem [#allocation3], %s508
        %p510 = pneg %p75
        %p511 = pneg %p72
        %s512 = sand.u32 %s40, 1
        %s513 = scalar_lea.sflag [#allocation7], %s512
        %s514 = sand.u32 %s88, 1
        %s515 = smul.addr %s514, 256
        %s516 = scalar_lea.vmem [#allocation6], %s515
        %p517 = pneg %p101
        %p518 = pneg %p98
        %p519 = pneg %p122
        %p520 = pneg %p119
        %p521 = pneg %p143
        %p522 = pneg %p140
        %p523 = pneg %p164
        %p524 = pneg %p161
        %p525 = pneg %p185
        %p526 = pneg %p182
        %p527 = pneg %p206
        %p528 = pneg %p203
        %p529 = pneg %p227
        %p530 = pneg %p224
        %p531 = pneg %p248
        %p532 = pneg %p245
        %p533 = pneg %p274
        %p534 = pneg %p271
        %s535 = sand.u32 %s261, 1
        %s536 = scalar_lea.sflag [#allocation5], %s535
        %s537 = sand.u32 %s261, 1
        %s538 = smul.addr %s537, 16
        %s539 = scalar_lea.vmem [#allocation12], %s538
        %p540 = pneg %p300
        %p541 = pneg %p297
        %s542 = sand.u32 %s40, 1
        %s543 = scalar_lea.sflag [#allocation14], %s542
        %s544 = sand.u32 %s287, 1
        %s545 = smul.addr %s544, 16
        %s546 = scalar_lea.vmem [#allocation13], %s545
        %p547 = pneg %p326
        %p548 = pneg %p323
        %s549 = sand.u32 %s40, 1
        %s550 = scalar_lea.sflag [#allocation14], %s549
        %s551 = sand.u32 %s313, 1
        %s552 = smul.addr %s551, 32
        %s553 = scalar_lea.vmem [#allocation15], %s552
        %p554 = pneg %p352
        %p555 = pneg %p349
        %s556 = sand.u32 %s339, 1
        %s557 = scalar_lea.sflag [#allocation17], %s556
        %s558 = sand.u32 %s339, 1
        %s559 = smul.addr %s558, 16
        %s560 = scalar_lea.vmem [#allocation16], %s559
        %s561 = smul.u32 2, %s44
        %s562 = smul.u32 2, %s45
        %s563 = smul.u32 32, %s45
        %s564 = smul.u32 2, %s44
        %s565 = smul.u32 2, %s44
        %s566 = smul.u32 2, %s44
        %s567 = smul.u32 2, %s44
        %p569 = scmp.eq.s32.totalorder %s45, 0
        // Predicated region
        $region77: #{tpu_custom_call.1} parent=55 // pred_check
          %p570 = pneg %p569
        $region78: #{tpu_custom_call.1} parent=55 // pred_check_branch
          %572 = sbr.rel (%p570) target = $region80
        $region79: #{tpu_custom_call.1} parent=55 // pred_region
          %573 = vst [vmem:[#allocation2] sm:$0xff] 0.0
          %574 = vst [vmem:[#allocation2 + $0x8] sm:$0xff] 0.0
          %575 = vst [vmem:[#allocation2 + $0x10] sm:$0xff] 0.0
          %576 = vst [vmem:[#allocation2 + $0x18] sm:$0xff] 0.0
        $region80: #{tpu_custom_call.1} parent=55 // pred_fallthru
          _
        %v577 = vld [vmem:[#allocation2] sm:$0xff]
        %v578 = vld [vmem:[#allocation2 + $0x8] sm:$0xff]
        %v579 = vld [vmem:[#allocation2 + $0x10] sm:$0xff]
        %v580 = vld [vmem:[#allocation2 + $0x18] sm:$0xff]
        %v581 = vld [vmem:[%s479] sm:$0xff]
        %v582 = vld [vmem:[%s479 + $0x8] sm:$0xff]
        %v583 = vld [vmem:[%s488] sm:$0xff]
        %v584 = vld [vmem:[%s488 + $0x8] sm:$0xff]
        %v585 = vld [vmem:[%s488 + $0x10] sm:$0xff]
        %v586 = vld [vmem:[%s488 + $0x18] sm:$0xff]
        %v587 = vld [vmem:[%s488 + $0x20] sm:$0xff]
        %v588 = vld [vmem:[%s488 + $0x28] sm:$0xff]
        %v589 = vld [vmem:[%s488 + $0x30] sm:$0xff]
        %v590 = vld [vmem:[%s488 + $0x38] sm:$0xff]
        %v591 = vld [vmem:[%s488 + $0x40] sm:$0xff]
        %v592 = vld [vmem:[%s488 + $0x48] sm:$0xff]
        %v593 = vld [vmem:[%s488 + $0x50] sm:$0xff]
        %v594 = vld [vmem:[%s488 + $0x58] sm:$0xff]
        %v595 = vld [vmem:[%s488 + $0x60] sm:$0xff]
        %v596 = vld [vmem:[%s488 + $0x68] sm:$0xff]
        %v597 = vld [vmem:[%s488 + $0x70] sm:$0xff]
        %v598 = vld [vmem:[%s488 + $0x78] sm:$0xff]
        %v599 = vld [vmem:[%s488 + $0x80] sm:$0xff]
        %v600 = vld [vmem:[%s488 + $0x88] sm:$0xff]
        %v601 = vld [vmem:[%s488 + $0x90] sm:$0xff]
        %v602 = vld [vmem:[%s488 + $0x98] sm:$0xff]
        %v603 = vld [vmem:[%s488 + $0xa0] sm:$0xff]
        %v604 = vld [vmem:[%s488 + $0xa8] sm:$0xff]
        %v605 = vld [vmem:[%s488 + $0xb0] sm:$0xff]
        %v606 = vld [vmem:[%s488 + $0xb8] sm:$0xff]
        %v607 = vld [vmem:[%s488 + $0xc0] sm:$0xff]
        %v608 = vld [vmem:[%s488 + $0xc8] sm:$0xff]
        %v609 = vld [vmem:[%s488 + $0xd0] sm:$0xff]
        %v610 = vld [vmem:[%s488 + $0xd8] sm:$0xff]
        %v611 = vld [vmem:[%s488 + $0xe0] sm:$0xff]
        %v612 = vld [vmem:[%s488 + $0xe8] sm:$0xff]
        %v613 = vld [vmem:[%s488 + $0xf0] sm:$0xff]
        %v614 = vld [vmem:[%s488 + $0xf8] sm:$0xff]
        %v617 = vunpack.c.l.b16 %v581
        %v618 = vunpack.c.h.b16 %v581
        %v619 = vunpack.c.l.b16 %v582
        %v620 = vunpack.c.h.b16 %v582
        %v621 = vpack.c.b16 %v619, %v617
        %v622 = vpack.c.b16 %v620, %v618
        %v657 = vunpack.c.l.b16 %v583
        %v658 = vunpack.c.h.b16 %v583
        %v659 = vunpack.c.l.b16 %v584
        %v660 = vunpack.c.h.b16 %v584
        %v661 = vunpack.c.l.b16 %v585
        %v662 = vunpack.c.h.b16 %v585
        %v663 = vunpack.c.l.b16 %v586
        %v664 = vunpack.c.h.b16 %v586
        %v665 = vunpack.c.l.b16 %v587
        %v666 = vunpack.c.h.b16 %v587
        %v667 = vunpack.c.l.b16 %v588
        %v668 = vunpack.c.h.b16 %v588
        %v669 = vunpack.c.l.b16 %v589
        %v670 = vunpack.c.h.b16 %v589
        %v671 = vunpack.c.l.b16 %v590
        %v672 = vunpack.c.h.b16 %v590
        %v673 = vunpack.c.l.b16 %v591
        %v674 = vunpack.c.h.b16 %v591
        %v675 = vunpack.c.l.b16 %v592
        %v676 = vunpack.c.h.b16 %v592
        %v677 = vunpack.c.l.b16 %v593
        %v678 = vunpack.c.h.b16 %v593
        %v679 = vunpack.c.l.b16 %v594
        %v680 = vunpack.c.h.b16 %v594
        %v681 = vunpack.c.l.b16 %v595
        %v682 = vunpack.c.h.b16 %v595
        %v683 = vunpack.c.l.b16 %v596
        %v684 = vunpack.c.h.b16 %v596
        %v685 = vunpack.c.l.b16 %v597
        %v686 = vunpack.c.h.b16 %v597
        %v687 = vunpack.c.l.b16 %v598
        %v688 = vunpack.c.h.b16 %v598
        %v689 = vunpack.c.l.b16 %v599
        %v690 = vunpack.c.h.b16 %v599
        %v691 = vunpack.c.l.b16 %v600
        %v692 = vunpack.c.h.b16 %v600
        %v693 = vunpack.c.l.b16 %v601
        %v694 = vunpack.c.h.b16 %v601
        %v695 = vunpack.c.l.b16 %v602
        %v696 = vunpack.c.h.b16 %v602
        %v697 = vunpack.c.l.b16 %v603
        %v698 = vunpack.c.h.b16 %v603
        %v699 = vunpack.c.l.b16 %v604
        %v700 = vunpack.c.h.b16 %v604
        %v701 = vunpack.c.l.b16 %v605
        %v702 = vunpack.c.h.b16 %v605
        %v703 = vunpack.c.l.b16 %v606
        %v704 = vunpack.c.h.b16 %v606
        %v705 = vunpack.c.l.b16 %v607
        %v706 = vunpack.c.h.b16 %v607
        %v707 = vunpack.c.l.b16 %v608
        %v708 = vunpack.c.h.b16 %v608
        %v709 = vunpack.c.l.b16 %v609
        %v710 = vunpack.c.h.b16 %v609
        %v711 = vunpack.c.l.b16 %v610
        %v712 = vunpack.c.h.b16 %v610
        %v713 = vunpack.c.l.b16 %v611
        %v714 = vunpack.c.h.b16 %v611
        %v715 = vunpack.c.l.b16 %v612
        %v716 = vunpack.c.h.b16 %v612
        %v717 = vunpack.c.l.b16 %v613
        %v718 = vunpack.c.h.b16 %v613
        %v719 = vunpack.c.l.b16 %v614
        %v720 = vunpack.c.h.b16 %v614
        %v721 = vpack.c.b16 %v659, %v657
        %v722 = vpack.c.b16 %v660, %v658
        %v723 = vpack.c.b16 %v663, %v661
        %v724 = vpack.c.b16 %v664, %v662
        %v725 = vpack.c.b16 %v667, %v665
        %v726 = vpack.c.b16 %v668, %v666
        %v727 = vpack.c.b16 %v671, %v669
        %v728 = vpack.c.b16 %v672, %v670
        %v729 = vpack.c.b16 %v675, %v673
        %v730 = vpack.c.b16 %v676, %v674
        %v731 = vpack.c.b16 %v679, %v677
        %v732 = vpack.c.b16 %v680, %v678
        %v733 = vpack.c.b16 %v683, %v681
        %v734 = vpack.c.b16 %v684, %v682
        %v735 = vpack.c.b16 %v687, %v685
        %v736 = vpack.c.b16 %v688, %v686
        %v737 = vpack.c.b16 %v691, %v689
        %v738 = vpack.c.b16 %v692, %v690
        %v739 = vpack.c.b16 %v695, %v693
        %v740 = vpack.c.b16 %v696, %v694
        %v741 = vpack.c.b16 %v699, %v697
        %v742 = vpack.c.b16 %v700, %v698
        %v743 = vpack.c.b16 %v703, %v701
        %v744 = vpack.c.b16 %v704, %v702
        %v745 = vpack.c.b16 %v707, %v705
        %v746 = vpack.c.b16 %v708, %v706
        %v747 = vpack.c.b16 %v711, %v709
        %v748 = vpack.c.b16 %v712, %v710
        %v749 = vpack.c.b16 %v715, %v713
        %v750 = vpack.c.b16 %v716, %v714
        %v751 = vpack.c.b16 %v719, %v717
        %v752 = vpack.c.b16 %v720, %v718
        %785 = vmatprep.subr.bf16.mxu0 %v736
        %786 = vmatpush1.bf16.msra.mxu0 %v735
        %787 = vmatprep.subr.bf16.mxu0 %v734
        %788 = vmatpush1.bf16.msra.mxu0 %v733
        %789 = vmatprep.subr.bf16.mxu0 %v732
        %790 = vmatpush1.bf16.msra.mxu0 %v731
        %791 = vmatprep.subr.bf16.mxu0 %v730
        %792 = vmatpush1.bf16.msra.mxu0 %v729
        %793 = vmatprep.subr.bf16.mxu0 %v728
        %794 = vmatpush1.bf16.msra.mxu0 %v727
        %795 = vmatprep.subr.bf16.mxu0 %v726
        %796 = vmatpush1.bf16.msra.mxu0 %v725
        %797 = vmatprep.subr.bf16.mxu0 %v724
        %798 = vmatpush1.bf16.msra.mxu0 %v723
        %799 = vmatprep.subr.bf16.mxu0 %v722
        %800 = vmatpush1.bf16.msra.mxu0 %v721
        %801 = vmatprep.subr.bf16.mxu0 %v752
        %802 = vmatpush2.bf16.msra.mxu0 %v751
        %803 = vmatprep.subr.bf16.mxu0 %v750
        %804 = vmatpush2.bf16.msra.mxu0 %v749
        %805 = vmatprep.subr.bf16.mxu0 %v748
        %806 = vmatpush2.bf16.msra.mxu0 %v747
        %807 = vmatprep.subr.bf16.mxu0 %v746
        %808 = vmatpush2.bf16.msra.mxu0 %v745
        %809 = vmatprep.subr.bf16.mxu0 %v744
        %810 = vmatpush2.bf16.msra.mxu0 %v743
        %811 = vmatprep.subr.bf16.mxu0 %v742
        %812 = vmatpush2.bf16.msra.mxu0 %v741
        %813 = vmatprep.subr.bf16.mxu0 %v740
        %814 = vmatpush2.bf16.msra.mxu0 %v739
        %815 = vmatprep.subr.bf16.mxu0 %v738
        %816 = vmatpush2.bf16.msra.mxu0 %v737
        %817 = vmatprep.mubr.bf16.mxu0 %v622
        %818 = vmatmul.mubr.bf16.gmra.mxu0 %v621
        %v819 = vpop.f32.mrf.mxu0
        %v820 = vadd.f32 0.0, %v819
        %v821 = vpop.f32.mrf.mxu0
        %v822 = vadd.f32 0.0, %v821
        %v823 = vpop.f32.mrf.mxu0
        %v824 = vadd.f32 0.0, %v823
        %v825 = vpop.f32.mrf.mxu0
        %v826 = vadd.f32 0.0, %v825
        %827 = vdwg.mxu0
        %v828 = vadd.f32 %v577, %v820
        %v829 = vadd.f32 %v578, %v822
        %v830 = vadd.f32 %v579, %v824
        %v831 = vadd.f32 %v580, %v826
        %832 = vst [vmem:[#allocation2] sm:$0xff] %v828
        %833 = vst [vmem:[#allocation2 + $0x8] sm:$0xff] %v829
        %834 = vst [vmem:[#allocation2 + $0x10] sm:$0xff] %v830
        %835 = vst [vmem:[#allocation2 + $0x18] sm:$0xff] %v831
        %p836 = scmp.eq.s32.totalorder %s45, 3
        // Predicated region
        $region81: #{tpu_custom_call.1} parent=55 // pred_check
          %p837 = pneg %p836
        $region82: #{tpu_custom_call.1} parent=55 // pred_check_branch
          %839 = sbr.rel (%p837) target = $region84
        $region83: #{tpu_custom_call.1} parent=55 // pred_region
          %v840 = vld [vmem:[#allocation2] sm:$0xff]
          %v841 = vld [vmem:[#allocation2 + $0x8] sm:$0xff]
          %v842 = vld [vmem:[#allocation2 + $0x10] sm:$0xff]
          %v843 = vld [vmem:[#allocation2 + $0x18] sm:$0xff]
          %v844 = vld [vmem:[%s2] sm:$0x3]
          %v846 = vlaneseq
          %v847 = vshrl.u32 %v846, 7
          %v848 = vsub.s32 0, %v847
          %v849 = vrot.slane %v844, %v848
          %v850 = vlaneseq
          %v851 = vshrl.u32 %v850, 7
          %v852 = vsub.s32 1, %v851
          %v853 = vrot.slane %v844, %v852
          %v856 = vadd.f32 %v840, %v849
          %v857 = vadd.f32 %v841, %v853
          %v858 = vadd.f32 %v842, %v849
          %v859 = vadd.f32 %v843, %v853
          %v860 = vmax.f32 %v856, 0.0
          %v861 = vmax.f32 %v857, 0.0
          %v862 = vmax.f32 %v858, 0.0
          %v863 = vmax.f32 %v859, 0.0
          %v864 = vpack.c.bf16 %v862, %v860
          %v865 = vpack.c.bf16 %v863, %v861
          %v866 = vld [vmem:[#allocation8] sm:$0xf]
          %v867 = vld [vmem:[#allocation8 + $0x4] sm:$0xf]
          %v868 = vld [vmem:[#allocation8 + $0x8] sm:$0xf]
          %v869 = vld [vmem:[#allocation8 + $0xc] sm:$0xf]
          %v870 = vld [vmem:[#allocation8 + $0x10] sm:$0xf]
          %v871 = vld [vmem:[#allocation8 + $0x14] sm:$0xf]
          %v872 = vld [vmem:[#allocation8 + $0x18] sm:$0xf]
          %v873 = vld [vmem:[#allocation8 + $0x1c] sm:$0xf]
          %v874 = vld [vmem:[#allocation8 + $0x20] sm:$0xf]
          %v875 = vld [vmem:[#allocation8 + $0x24] sm:$0xf]
          %v876 = vld [vmem:[#allocation8 + $0x28] sm:$0xf]
          %v877 = vld [vmem:[#allocation8 + $0x2c] sm:$0xf]
          %v878 = vld [vmem:[#allocation8 + $0x30] sm:$0xf]
          %v879 = vld [vmem:[#allocation8 + $0x34] sm:$0xf]
          %v880 = vld [vmem:[#allocation8 + $0x38] sm:$0xf]
          %v881 = vld [vmem:[#allocation8 + $0x3c] sm:$0xf]
          %v882 = vld [vmem:[#allocation8 + $0x40] sm:$0xf]
          %v883 = vld [vmem:[#allocation8 + $0x44] sm:$0xf]
          %v884 = vld [vmem:[#allocation8 + $0x48] sm:$0xf]
          %v885 = vld [vmem:[#allocation8 + $0x4c] sm:$0xf]
          %v886 = vld [vmem:[#allocation8 + $0x50] sm:$0xf]
          %v887 = vld [vmem:[#allocation8 + $0x54] sm:$0xf]
          %v888 = vld [vmem:[#allocation8 + $0x58] sm:$0xf]
          %v889 = vld [vmem:[#allocation8 + $0x5c] sm:$0xf]
          %v890 = vld [vmem:[#allocation8 + $0x60] sm:$0xf]
          %v891 = vld [vmem:[#allocation8 + $0x64] sm:$0xf]
          %v892 = vld [vmem:[#allocation8 + $0x68] sm:$0xf]
          %v893 = vld [vmem:[#allocation8 + $0x6c] sm:$0xf]
          %v894 = vld [vmem:[#allocation8 + $0x70] sm:$0xf]
          %v895 = vld [vmem:[#allocation8 + $0x74] sm:$0xf]
          %v896 = vld [vmem:[#allocation8 + $0x78] sm:$0xf]
          %v897 = vld [vmem:[#allocation8 + $0x7c] sm:$0xf]
          %v898 = vld [vmem:[%s4] sm:$0x1]
          %v900 = vlaneseq
          %v901 = vshrl.u32 %v900, 7
          %v902 = vsub.s32 0, %v901
          %v903 = vrot.slane %v898, %v902
          %v937 = vunpack.c.l.b16 %v866
          %v938 = vunpack.c.l.b16 %v867
          %v939 = vunpack.c.l.b16 %v868
          %v940 = vunpack.c.l.b16 %v869
          %v941 = vunpack.c.l.b16 %v870
          %v942 = vunpack.c.l.b16 %v871
          %v943 = vunpack.c.l.b16 %v872
          %v944 = vunpack.c.l.b16 %v873
          %v945 = vunpack.c.l.b16 %v874
          %v946 = vunpack.c.l.b16 %v875
          %v947 = vunpack.c.l.b16 %v876
          %v948 = vunpack.c.l.b16 %v877
          %v949 = vunpack.c.l.b16 %v878
          %v950 = vunpack.c.l.b16 %v879
          %v951 = vunpack.c.l.b16 %v880
          %v952 = vunpack.c.l.b16 %v881
          %v953 = vunpack.c.l.b16 %v882
          %v954 = vunpack.c.l.b16 %v883
          %v955 = vunpack.c.l.b16 %v884
          %v956 = vunpack.c.l.b16 %v885
          %v957 = vunpack.c.l.b16 %v886
          %v958 = vunpack.c.l.b16 %v887
          %v959 = vunpack.c.l.b16 %v888
          %v960 = vunpack.c.l.b16 %v889
          %v961 = vunpack.c.l.b16 %v890
          %v962 = vunpack.c.l.b16 %v891
          %v963 = vunpack.c.l.b16 %v892
          %v964 = vunpack.c.l.b16 %v893
          %v965 = vunpack.c.l.b16 %v894
          %v966 = vunpack.c.l.b16 %v895
          %v967 = vunpack.c.l.b16 %v896
          %v968 = vunpack.c.l.b16 %v897
          %v969 = vpack.c.b16 %v938, %v937
          %v970 = vpack.c.b16 %v940, %v939
          %v971 = vpack.c.b16 %v942, %v941
          %v972 = vpack.c.b16 %v944, %v943
          %v973 = vpack.c.b16 %v946, %v945
          %v974 = vpack.c.b16 %v948, %v947
          %v975 = vpack.c.b16 %v950, %v949
          %v976 = vpack.c.b16 %v952, %v951
          %v977 = vpack.c.b16 %v954, %v953
          %v978 = vpack.c.b16 %v956, %v955
          %v979 = vpack.c.b16 %v958, %v957
          %v980 = vpack.c.b16 %v960, %v959
          %v981 = vpack.c.b16 %v962, %v961
          %v982 = vpack.c.b16 %v964, %v963
          %v983 = vpack.c.b16 %v966, %v965
          %v984 = vpack.c.b16 %v968, %v967
          %1001 = vmatprep.subr.bf16.mxu0 0
          %1002 = vmatpush1.bf16.msra.mxu0 %v976
          %1003 = vmatprep.subr.bf16.mxu0 0
          %1004 = vmatpush1.bf16.msra.mxu0 %v975
          %1005 = vmatprep.subr.bf16.mxu0 0
          %1006 = vmatpush1.bf16.msra.mxu0 %v974
          %1007 = vmatprep.subr.bf16.mxu0 0
          %1008 = vmatpush1.bf16.msra.mxu0 %v973
          %1009 = vmatprep.subr.bf16.mxu0 0
          %1010 = vmatpush1.bf16.msra.mxu0 %v972
          %1011 = vmatprep.subr.bf16.mxu0 0
          %1012 = vmatpush1.bf16.msra.mxu0 %v971
          %1013 = vmatprep.subr.bf16.mxu0 0
          %1014 = vmatpush1.bf16.msra.mxu0 %v970
          %1015 = vmatprep.subr.bf16.mxu0 0
          %1016 = vmatpush1.bf16.msra.mxu0 %v969
          %1017 = vmatprep.subr.bf16.mxu0 0
          %1018 = vmatpush2.bf16.msra.mxu0 %v984
          %1019 = vmatprep.subr.bf16.mxu0 0
          %1020 = vmatpush2.bf16.msra.mxu0 %v983
          %1021 = vmatprep.subr.bf16.mxu0 0
          %1022 = vmatpush2.bf16.msra.mxu0 %v982
          %1023 = vmatprep.subr.bf16.mxu0 0
          %1024 = vmatpush2.bf16.msra.mxu0 %v981
          %1025 = vmatprep.subr.bf16.mxu0 0
          %1026 = vmatpush2.bf16.msra.mxu0 %v980
          %1027 = vmatprep.subr.bf16.mxu0 0
          %1028 = vmatpush2.bf16.msra.mxu0 %v979
          %1029 = vmatprep.subr.bf16.mxu0 0
          %1030 = vmatpush2.bf16.msra.mxu0 %v978
          %1031 = vmatprep.subr.bf16.mxu0 0
          %1032 = vmatpush2.bf16.msra.mxu0 %v977
          %1033 = vmatprep.mubr.bf16.mxu0 %v865
          %1034 = vmatmul.mubr.bf16.gmra.mxu0 %v864
          %v1035 = vpop.f32.mrf.mxu0
          %v1036 = vadd.f32 %v903, %v1035
          %v1037 = vpop.f32.mrf.mxu0
          %v1038 = vpop.f32.mrf.mxu0
          %v1039 = vadd.f32 %v903, %v1038
          %v1040 = vpop.f32.mrf.mxu0
          %1041 = vdwg.mxu0
          %v1042 = vmax.f32 %v1036, 0.0
          %v1043 = vmax.f32 %v1039, 0.0
          %v1044 = vpack.c.bf16 %v1043, %v1042
          %v1045 = vld [vmem:[#allocation9] sm:$0xf]
          %v1046 = vld [vmem:[#allocation9 + $0x4] sm:$0xf]
          %v1047 = vld [vmem:[#allocation9 + $0x8] sm:$0xf]
          %v1048 = vld [vmem:[#allocation9 + $0xc] sm:$0xf]
          %v1049 = vld [vmem:[#allocation9 + $0x10] sm:$0xf]
          %v1050 = vld [vmem:[#allocation9 + $0x14] sm:$0xf]
          %v1051 = vld [vmem:[#allocation9 + $0x18] sm:$0xf]
          %v1052 = vld [vmem:[#allocation9 + $0x1c] sm:$0xf]
          %v1053 = vld [vmem:[#allocation9 + $0x20] sm:$0xf]
          %v1054 = vld [vmem:[#allocation9 + $0x24] sm:$0xf]
          %v1055 = vld [vmem:[#allocation9 + $0x28] sm:$0xf]
          %v1056 = vld [vmem:[#allocation9 + $0x2c] sm:$0xf]
          %v1057 = vld [vmem:[#allocation9 + $0x30] sm:$0xf]
          %v1058 = vld [vmem:[#allocation9 + $0x34] sm:$0xf]
          %v1059 = vld [vmem:[#allocation9 + $0x38] sm:$0xf]
          %v1060 = vld [vmem:[#allocation9 + $0x3c] sm:$0xf]
          %v1061 = vld [vmem:[%s6] sm:$0x1]
          %v1063 = vlaneseq
          %v1064 = vshrl.u32 %v1063, 7
          %v1065 = vsub.s32 0, %v1064
          %v1066 = vrot.slane %v1061, %v1065
          %v1084 = vunpack.c.l.b16 %v1045
          %v1085 = vunpack.c.l.b16 %v1046
          %v1086 = vunpack.c.l.b16 %v1047
          %v1087 = vunpack.c.l.b16 %v1048
          %v1088 = vunpack.c.l.b16 %v1049
          %v1089 = vunpack.c.l.b16 %v1050
          %v1090 = vunpack.c.l.b16 %v1051
          %v1091 = vunpack.c.l.b16 %v1052
          %v1092 = vunpack.c.l.b16 %v1053
          %v1093 = vunpack.c.l.b16 %v1054
          %v1094 = vunpack.c.l.b16 %v1055
          %v1095 = vunpack.c.l.b16 %v1056
          %v1096 = vunpack.c.l.b16 %v1057
          %v1097 = vunpack.c.l.b16 %v1058
          %v1098 = vunpack.c.l.b16 %v1059
          %v1099 = vunpack.c.l.b16 %v1060
          %v1100 = vpack.c.b16 %v1085, %v1084
          %v1101 = vpack.c.b16 %v1087, %v1086
          %v1102 = vpack.c.b16 %v1089, %v1088
          %v1103 = vpack.c.b16 %v1091, %v1090
          %v1104 = vpack.c.b16 %v1093, %v1092
          %v1105 = vpack.c.b16 %v1095, %v1094
          %v1106 = vpack.c.b16 %v1097, %v1096
          %v1107 = vpack.c.b16 %v1099, %v1098
          %1116 = vmatprep.subr.bf16.mxu0 0
          %1117 = vmatpush1.bf16.msra.mxu0 %v1107
          %1118 = vmatprep.subr.bf16.mxu0 0
          %1119 = vmatpush1.bf16.msra.mxu0 %v1106
          %1120 = vmatprep.subr.bf16.mxu0 0
          %1121 = vmatpush1.bf16.msra.mxu0 %v1105
          %1122 = vmatprep.subr.bf16.mxu0 0
          %1123 = vmatpush1.bf16.msra.mxu0 %v1104
          %1124 = vmatprep.subr.bf16.mxu0 0
          %1125 = vmatpush1.bf16.msra.mxu0 %v1103
          %1126 = vmatprep.subr.bf16.mxu0 0
          %1127 = vmatpush1.bf16.msra.mxu0 %v1102
          %1128 = vmatprep.subr.bf16.mxu0 0
          %1129 = vmatpush1.bf16.msra.mxu0 %v1101
          %1130 = vmatprep.subr.bf16.mxu0 0
          %1131 = vmatpush1.bf16.msra.mxu0 %v1100
          %1132 = vmatprep.subr.bf16.mxu0 0
          %1133 = vmatpush2.bf16.msra.mxu0 0
          %1134 = vmatprep.subr.bf16.mxu0 0
          %1135 = vmatpush2.bf16.msra.mxu0 0
          %1136 = vmatprep.subr.bf16.mxu0 0
          %1137 = vmatpush2.bf16.msra.mxu0 0
          %1138 = vmatprep.subr.bf16.mxu0 0
          %1139 = vmatpush2.bf16.msra.mxu0 0
          %1140 = vmatprep.subr.bf16.mxu0 0
          %1141 = vmatpush2.bf16.msra.mxu0 0
          %1142 = vmatprep.subr.bf16.mxu0 0
          %1143 = vmatpush2.bf16.msra.mxu0 0
          %1144 = vmatprep.subr.bf16.mxu0 0
          %1145 = vmatpush2.bf16.msra.mxu0 0
          %1146 = vmatprep.subr.bf16.mxu0 0
          %1147 = vmatpush2.bf16.msra.mxu0 0
          %1148 = vmatprep.mubr.bf16.mxu0 0
          %1149 = vmatmul.mubr.bf16.gmra.mxu0 %v1044
          %v1150 = vpop.f32.mrf.mxu0
          %v1151 = vadd.f32 %v1066, %v1150
          %v1152 = vpop.f32.mrf.mxu0
          %v1153 = vpop.f32.mrf.mxu0
          %v1154 = vadd.f32 %v1066, %v1153
          %v1155 = vpop.f32.mrf.mxu0
          %1156 = vdwg.mxu0
          %1157 = vst [vmem:[%s539] sm:$0xff] %v1151
          %1158 = vst [vmem:[%s539 + $0x8] sm:$0xff] %v1154
          %v1159 = vld [vmem:[#allocation11] sm:$0xf]
          %v1160 = vld [vmem:[#allocation11 + $0x4] sm:$0xf]
          %v1161 = vld [vmem:[#allocation11 + $0x8] sm:$0xf]
          %v1162 = vld [vmem:[#allocation11 + $0xc] sm:$0xf]
          %v1163 = vld [vmem:[#allocation11 + $0x10] sm:$0xf]
          %v1164 = vld [vmem:[#allocation11 + $0x14] sm:$0xf]
          %v1165 = vld [vmem:[#allocation11 + $0x18] sm:$0xf]
          %v1166 = vld [vmem:[#allocation11 + $0x1c] sm:$0xf]
          %v1167 = vld [vmem:[#allocation11 + $0x20] sm:$0xf]
          %v1168 = vld [vmem:[#allocation11 + $0x24] sm:$0xf]
          %v1169 = vld [vmem:[#allocation11 + $0x28] sm:$0xf]
          %v1170 = vld [vmem:[#allocation11 + $0x2c] sm:$0xf]
          %v1171 = vld [vmem:[#allocation11 + $0x30] sm:$0xf]
          %v1172 = vld [vmem:[#allocation11 + $0x34] sm:$0xf]
          %v1173 = vld [vmem:[#allocation11 + $0x38] sm:$0xf]
          %v1174 = vld [vmem:[#allocation11 + $0x3c] sm:$0xf]
          %v1175 = vld [vmem:[#allocation11 + $0x40] sm:$0xf]
          %v1176 = vld [vmem:[#allocation11 + $0x44] sm:$0xf]
          %v1177 = vld [vmem:[#allocation11 + $0x48] sm:$0xf]
          %v1178 = vld [vmem:[#allocation11 + $0x4c] sm:$0xf]
          %v1179 = vld [vmem:[#allocation11 + $0x50] sm:$0xf]
          %v1180 = vld [vmem:[#allocation11 + $0x54] sm:$0xf]
          %v1181 = vld [vmem:[#allocation11 + $0x58] sm:$0xf]
          %v1182 = vld [vmem:[#allocation11 + $0x5c] sm:$0xf]
          %v1183 = vld [vmem:[#allocation11 + $0x60] sm:$0xf]
          %v1184 = vld [vmem:[#allocation11 + $0x64] sm:$0xf]
          %v1185 = vld [vmem:[#allocation11 + $0x68] sm:$0xf]
          %v1186 = vld [vmem:[#allocation11 + $0x6c] sm:$0xf]
          %v1187 = vld [vmem:[#allocation11 + $0x70] sm:$0xf]
          %v1188 = vld [vmem:[#allocation11 + $0x74] sm:$0xf]
          %v1189 = vld [vmem:[#allocation11 + $0x78] sm:$0xf]
          %v1190 = vld [vmem:[#allocation11 + $0x7c] sm:$0xf]
          %v1191 = vld [vmem:[%s8] sm:$0x1]
          %v1193 = vlaneseq
          %v1194 = vshrl.u32 %v1193, 7
          %v1195 = vsub.s32 0, %v1194
          %v1196 = vrot.slane %v1191, %v1195
          %v1230 = vunpack.c.l.b16 %v1159
          %v1231 = vunpack.c.l.b16 %v1160
          %v1232 = vunpack.c.l.b16 %v1161
          %v1233 = vunpack.c.l.b16 %v1162
          %v1234 = vunpack.c.l.b16 %v1163
          %v1235 = vunpack.c.l.b16 %v1164
          %v1236 = vunpack.c.l.b16 %v1165
          %v1237 = vunpack.c.l.b16 %v1166
          %v1238 = vunpack.c.l.b16 %v1167
          %v1239 = vunpack.c.l.b16 %v1168
          %v1240 = vunpack.c.l.b16 %v1169
          %v1241 = vunpack.c.l.b16 %v1170
          %v1242 = vunpack.c.l.b16 %v1171
          %v1243 = vunpack.c.l.b16 %v1172
          %v1244 = vunpack.c.l.b16 %v1173
          %v1245 = vunpack.c.l.b16 %v1174
          %v1246 = vunpack.c.l.b16 %v1175
          %v1247 = vunpack.c.l.b16 %v1176
          %v1248 = vunpack.c.l.b16 %v1177
          %v1249 = vunpack.c.l.b16 %v1178
          %v1250 = vunpack.c.l.b16 %v1179
          %v1251 = vunpack.c.l.b16 %v1180
          %v1252 = vunpack.c.l.b16 %v1181
          %v1253 = vunpack.c.l.b16 %v1182
          %v1254 = vunpack.c.l.b16 %v1183
          %v1255 = vunpack.c.l.b16 %v1184
          %v1256 = vunpack.c.l.b16 %v1185
          %v1257 = vunpack.c.l.b16 %v1186
          %v1258 = vunpack.c.l.b16 %v1187
          %v1259 = vunpack.c.l.b16 %v1188
          %v1260 = vunpack.c.l.b16 %v1189
          %v1261 = vunpack.c.l.b16 %v1190
          %v1262 = vpack.c.b16 %v1231, %v1230
          %v1263 = vpack.c.b16 %v1233, %v1232
          %v1264 = vpack.c.b16 %v1235, %v1234
          %v1265 = vpack.c.b16 %v1237, %v1236
          %v1266 = vpack.c.b16 %v1239, %v1238
          %v1267 = vpack.c.b16 %v1241, %v1240
          %v1268 = vpack.c.b16 %v1243, %v1242
          %v1269 = vpack.c.b16 %v1245, %v1244
          %v1270 = vpack.c.b16 %v1247, %v1246
          %v1271 = vpack.c.b16 %v1249, %v1248
          %v1272 = vpack.c.b16 %v1251, %v1250
          %v1273 = vpack.c.b16 %v1253, %v1252
          %v1274 = vpack.c.b16 %v1255, %v1254
          %v1275 = vpack.c.b16 %v1257, %v1256
          %v1276 = vpack.c.b16 %v1259, %v1258
          %v1277 = vpack.c.b16 %v1261, %v1260
          %1294 = vmatprep.subr.bf16.mxu0 0
          %1295 = vmatpush1.bf16.msra.mxu0 %v1269
          %1296 = vmatprep.subr.bf16.mxu0 0
          %1297 = vmatpush1.bf16.msra.mxu0 %v1268
          %1298 = vmatprep.subr.bf16.mxu0 0
          %1299 = vmatpush1.bf16.msra.mxu0 %v1267
          %1300 = vmatprep.subr.bf16.mxu0 0
          %1301 = vmatpush1.bf16.msra.mxu0 %v1266
          %1302 = vmatprep.subr.bf16.mxu0 0
          %1303 = vmatpush1.bf16.msra.mxu0 %v1265
          %1304 = vmatprep.subr.bf16.mxu0 0
          %1305 = vmatpush1.bf16.msra.mxu0 %v1264
          %1306 = vmatprep.subr.bf16.mxu0 0
          %1307 = vmatpush1.bf16.msra.mxu0 %v1263
          %1308 = vmatprep.subr.bf16.mxu0 0
          %1309 = vmatpush1.bf16.msra.mxu0 %v1262
          %1310 = vmatprep.subr.bf16.mxu0 0
          %1311 = vmatpush2.bf16.msra.mxu0 %v1277
          %1312 = vmatprep.subr.bf16.mxu0 0
          %1313 = vmatpush2.bf16.msra.mxu0 %v1276
          %1314 = vmatprep.subr.bf16.mxu0 0
          %1315 = vmatpush2.bf16.msra.mxu0 %v1275
          %1316 = vmatprep.subr.bf16.mxu0 0
          %1317 = vmatpush2.bf16.msra.mxu0 %v1274
          %1318 = vmatprep.subr.bf16.mxu0 0
          %1319 = vmatpush2.bf16.msra.mxu0 %v1273
          %1320 = vmatprep.subr.bf16.mxu0 0
          %1321 = vmatpush2.bf16.msra.mxu0 %v1272
          %1322 = vmatprep.subr.bf16.mxu0 0
          %1323 = vmatpush2.bf16.msra.mxu0 %v1271
          %1324 = vmatprep.subr.bf16.mxu0 0
          %1325 = vmatpush2.bf16.msra.mxu0 %v1270
          %1326 = vmatprep.mubr.bf16.mxu0 %v865
          %1327 = vmatmul.mubr.bf16.gmra.mxu0 %v864
          %v1328 = vpop.f32.mrf.mxu0
          %v1329 = vadd.f32 %v1196, %v1328
          %v1330 = vpop.f32.mrf.mxu0
          %v1331 = vpop.f32.mrf.mxu0
          %v1332 = vadd.f32 %v1196, %v1331
          %v1333 = vpop.f32.mrf.mxu0
          %1334 = vdwg.mxu0
          %1335 = vst [vmem:[%s546] sm:$0xff] %v1329
          %1336 = vst [vmem:[%s546 + $0x8] sm:$0xff] %v1332
          %1337 = vst [vmem:[%s553] sm:$0xff] %v860
          %1338 = vst [vmem:[%s553 + $0x8] sm:$0xff] %v861
          %1339 = vst [vmem:[%s553 + $0x10] sm:$0xff] %v862
          %1340 = vst [vmem:[%s553 + $0x18] sm:$0xff] %v863
          %1341 = vst [vmem:[%s560] sm:$0xff] %v1042
          %1342 = vst [vmem:[%s560 + $0x8] sm:$0xff] %v1043
        $region84: #{tpu_custom_call.1} parent=55 // pred_fallthru
          _
        %s1343 = sand.u32 %s261, 1
        %s1344 = scalar_lea.sflag [#allocation5], %s1343
        %s1345 = sand.u32 %s261, 1
        %s1346 = smul.addr %s1345, 16
        %s1347 = scalar_lea.vmem [#allocation12], %s1346
        %s1348 = sand.u32 %s40, 1
        %s1349 = scalar_lea.sflag [#allocation14], %s1348
        %s1350 = sand.u32 %s287, 1
        %s1351 = smul.addr %s1350, 16
        %s1352 = scalar_lea.vmem [#allocation13], %s1351
        %s1353 = sand.u32 %s40, 1
        %s1354 = scalar_lea.sflag [#allocation14], %s1353
        %s1355 = sand.u32 %s313, 1
        %s1356 = smul.addr %s1355, 32
        %s1357 = scalar_lea.vmem [#allocation15], %s1356
        %s1358 = sand.u32 %s339, 1
        %s1359 = scalar_lea.sflag [#allocation17], %s1358
        %s1360 = sand.u32 %s339, 1
        %s1361 = smul.addr %s1360, 16
        %s1362 = scalar_lea.vmem [#allocation16], %s1361
        // Predicated region
        $region85: #{tpu_custom_call.1} parent=55 // pred_check
          %p1363 = pneg %p271
        $region86: #{tpu_custom_call.1} parent=55 // pred_check_branch
          %1365 = sbr.rel (%p1363) target = $region88
        $region87: #{tpu_custom_call.1} parent=55 // pred_region
          %s1366 = smul.u32 2, %s44
          %s1368 = ssub.s32 256, 256
          %1369 = vsyncadd %s1344, %s1368
          %s1370 = smul.addr %s1366, 128
          %s1371 = scalar_lea.hbm %s9, %s1370
          %s1372 = sshll.u32 %s1347, 4
          %s1373 = int_to_ptr.vmem [resolvable:$true] %s1372
          %1378 = dma.vmem_to_hbm [thread:$0]  %s1373, 256, %s1371, %s1344, 128, 128, 8
        $region88: #{tpu_custom_call.1} parent=55 // pred_fallthru
          _
        // Predicated region
        $region89: #{tpu_custom_call.1} parent=55 // pred_check
          %p1379 = pneg %p297
        $region90: #{tpu_custom_call.1} parent=55 // pred_check_branch
          %1381 = sbr.rel (%p1379) target = $region92
        $region91: #{tpu_custom_call.1} parent=55 // pred_region
          %s1382 = smul.u32 2, %s44
          %s1384 = ssub.s32 256, 256
          %1385 = vsyncadd %s1349, %s1384
          %s1386 = smul.addr %s1382, 128
          %s1387 = scalar_lea.hbm %s10, %s1386
          %s1388 = sshll.u32 %s1352, 4
          %s1389 = int_to_ptr.vmem [resolvable:$true] %s1388
          %1394 = dma.vmem_to_hbm [thread:$0]  %s1389, 256, %s1387, %s1349, 128, 128, 8
        $region92: #{tpu_custom_call.1} parent=55 // pred_fallthru
          _
        // Predicated region
        $region93: #{tpu_custom_call.1} parent=55 // pred_check
          %p1395 = pneg %p323
        $region94: #{tpu_custom_call.1} parent=55 // pred_check_branch
          %1397 = sbr.rel (%p1395) target = $region96
        $region95: #{tpu_custom_call.1} parent=55 // pred_region
          %s1398 = smul.u32 2, %s44
          %s1400 = ssub.s32 512, 512
          %1401 = vsyncadd %s1354, %s1400
          %s1402 = smul.addr %s1398, 2
          %s1403 = smul.addr %s1402, 128
          %s1404 = scalar_lea.hbm %s11, %s1403
          %s1405 = sshll.u32 %s1357, 4
          %s1406 = int_to_ptr.vmem [resolvable:$true] %s1405
          %1411 = dma.vmem_to_hbm [thread:$0]  %s1406, 512, %s1404, %s1354, 256, 256, 16
        $region96: #{tpu_custom_call.1} parent=55 // pred_fallthru
          _
        // Predicated region
        $region97: #{tpu_custom_call.1} parent=55 // pred_check
          %p1412 = pneg %p349
        $region98: #{tpu_custom_call.1} parent=55 // pred_check_branch
          %1414 = sbr.rel (%p1412) target = $region100
        $region99: #{tpu_custom_call.1} parent=55 // pred_region
          %s1415 = smul.u32 2, %s44
          %s1417 = ssub.s32 256, 256
          %1418 = vsyncadd %s1359, %s1417
          %s1419 = smul.addr %s1415, 128
          %s1420 = scalar_lea.hbm %s12, %s1419
          %s1421 = sshll.u32 %s1362, 4
          %s1422 = int_to_ptr.vmem [resolvable:$true] %s1421
          %1427 = dma.vmem_to_hbm [thread:$0]  %s1422, 256, %s1420, %s1359, 128, 128, 8
        $region100: #{tpu_custom_call.1} parent=55 // pred_fallthru
          _
      $region56: #{tpu_custom_call.1} parent=5 // pred_fallthru
        _
      %p1428 = scmp.le.s32.totalorder 2, %s35
      // Predicated region
      $region101: #{tpu_custom_call.1} parent=5 // pred_check
        %p1429 = pneg %p1428
      $region102: #{tpu_custom_call.1} parent=5 // pred_check_branch
        %1431 = sbr.rel (%p1429) target = $region104
      $region103: #{tpu_custom_call.1} parent=5 // pred_region
        %s1432 = ssub.s32 %s35, 2
        // Predicated region
        $region105: #{tpu_custom_call.1} parent=103 // pred_check
          %p1433 = pneg %p277
        $region106: #{tpu_custom_call.1} parent=103 // pred_check_branch
          %1435 = sbr.rel (%p1433) target = $region108
        $region107: #{tpu_custom_call.1} parent=103 // pred_region
          %s1436 = sand.u32 %s262, 1
          %s1437 = scalar_lea.sflag [#allocation5], %s1436
          %s1438 = sand.u32 %s262, 1
          %s1439 = smul.addr %s1438, 16
          %s1440 = scalar_lea.vmem [#allocation12], %s1439
          %1441 = dma.done %s1437, 256
        $region108: #{tpu_custom_call.1} parent=103 // pred_fallthru
          _
        // Predicated region
        $region109: #{tpu_custom_call.1} parent=103 // pred_check
          %p1442 = pneg %p303
        $region110: #{tpu_custom_call.1} parent=103 // pred_check_branch
          %1444 = sbr.rel (%p1442) target = $region112
        $region111: #{tpu_custom_call.1} parent=103 // pred_region
          %s1445 = sand.u32 %s41, 1
          %s1446 = scalar_lea.sflag [#allocation14], %s1445
          %s1447 = sand.u32 %s288, 1
          %s1448 = smul.addr %s1447, 16
          %s1449 = scalar_lea.vmem [#allocation13], %s1448
          %1450 = dma.done %s1446, 256
        $region112: #{tpu_custom_call.1} parent=103 // pred_fallthru
          _
        // Predicated region
        $region113: #{tpu_custom_call.1} parent=103 // pred_check
          %p1451 = pneg %p329
        $region114: #{tpu_custom_call.1} parent=103 // pred_check_branch
          %1453 = sbr.rel (%p1451) target = $region116
        $region115: #{tpu_custom_call.1} parent=103 // pred_region
          %s1454 = sand.u32 %s41, 1
          %s1455 = scalar_lea.sflag [#allocation14], %s1454
          %s1456 = sand.u32 %s314, 1
          %s1457 = smul.addr %s1456, 32
          %s1458 = scalar_lea.vmem [#allocation15], %s1457
          %1459 = dma.done %s1455, 512
        $region116: #{tpu_custom_call.1} parent=103 // pred_fallthru
          _
        // Predicated region
        $region117: #{tpu_custom_call.1} parent=103 // pred_check
          %p1460 = pneg %p355
        $region118: #{tpu_custom_call.1} parent=103 // pred_check_branch
          %1462 = sbr.rel (%p1460) target = $region120
        $region119: #{tpu_custom_call.1} parent=103 // pred_region
          %s1463 = sand.u32 %s340, 1
          %s1464 = scalar_lea.sflag [#allocation17], %s1463
          %s1465 = sand.u32 %s340, 1
          %s1466 = smul.addr %s1465, 16
          %s1467 = scalar_lea.vmem [#allocation16], %s1466
          %1468 = dma.done %s1464, 256
        $region120: #{tpu_custom_call.1} parent=103 // pred_fallthru
          _
      $region104: #{tpu_custom_call.1} parent=5 // pred_fallthru
        _
    $region6: #{tpu_custom_call.1} parent=1 // loop_footer
      %s39 = sadd.s32 1, %s35
    $region7: #{tpu_custom_call.1} parent=1 // loop_footer_branch
      %34 = sbr.rel target = $region3
    $region8: #{tpu_custom_call.1} parent=1 // loop_exit
      _
    %1469 = vsyncpa [#allocation4], 1
    %s1470 = scalar_lea.sflag [#allocation4], 1
    %1471 = vsyncpa %s1470, 1
    %1472 = vsyncpa [#allocation7], 1
    %s1473 = scalar_lea.sflag [#allocation7], 1
    %1474 = vsyncpa %s1473, 1
    %1475 = vsyncpa [#allocation10], 1
    %1476 = vsyncpa [#allocation5], 1
    %s1477 = scalar_lea.sflag [#allocation5], 1
    %1478 = vsyncpa %s1477, 1
    %1479 = vsyncpa [#allocation14], 1
    %s1480 = scalar_lea.sflag [#allocation14], 1
    %1481 = vsyncpa %s1480, 1
    %1482 = vsyncpa [#allocation17], 1
    %s1483 = scalar_lea.sflag [#allocation17], 1
    %1484 = vsyncpa %s1483, 1

</llo_original>
